<compile_context>
chip_gen: v7x
topology: tpu7x:2x2x1
jax: 0.10.0
libtpu: 0.0.40
codegen_flags: <defaults>
</compile_context>

<pallas_src>
import numpy as np

import jax
import jax.numpy as jnp
from jax.experimental import pallas as pl
from jax.experimental.pallas import tpu as pltpu


# Static problem sizes implied by the module's forward().
C_IN, C_OUT = 6, 16            # conv2 channels
KH = KW = 5                    # conv2 kernel
H_IN = W_IN = 14               # input spatial (so that fc1 sees 16*5*5 = 400)
PH = PW = 5                    # pooled spatial
WC = 2 * (W_IN // 2) * C_IN    # 84  : packed (wr, ww, c) lane width
K_CONV = KH * WC               # 420 : stacked contraction width
LANES = 128                    # padded lane width for every activation
TILE_N = 8                     # batch tile (multiple of 8)


# ---------------------------------------------------------------------------
# The single fused Pallas kernel (one invocation per batch tile).
# ---------------------------------------------------------------------------
def _cnn_fused_kernel(x_ref, v_ref, cb_ref, w1_ref, b1_ref,
                      w2_ref, b2_ref, w3_ref, b3_ref, o_ref):
    # x_ref : (2*5*TN, 420) bf16  rows = (dh, ph, t), lanes = (i, wr, ww, c)
    # v_ref : (420, 256)    bf16  cols = (dw, pw, co), each dw group padded to 128
    # cb_ref: (1, 128) f32        conv bias tiled over pw, zero-padded
    # w1_ref: (5, 128, 128) bf16  per-ph fc1 blocks (flatten perm folded in)
    # w2_ref: (128, 128) bf16 ; w3_ref: (128, 128) bf16 ; biases (1, 128) f32
    # o_ref : (TN, 128) f32       lane-dense padded logits
    f32 = jnp.float32
    bf16 = jnp.bfloat16
    tn = o_ref.shape[0]
    h5 = PH * tn

    # conv2 as ONE MXU dot: M = 2*5*TN, K = 420, N = 256.
    acc = jnp.dot(x_ref[...], v_ref[...], preferred_element_type=f32)

    # Fused 2x2 maxpool: max over dh (sublane halves) and dw (lane halves);
    # bias add + ReLU once afterwards (both commute with the max).
    m = jnp.maximum(jnp.maximum(acc[:h5, :LANES], acc[:h5, LANES:]),
                    jnp.maximum(acc[h5:, :LANES], acc[h5:, LANES:]))
    pooled = jnp.maximum(m + cb_ref[...], 0.0)              # (5*TN, 128) f32

    # fc1: flatten permutation folded into w1 -> 5 accumulated dots over ph.
    h = jnp.dot(pooled[:tn].astype(bf16), w1_ref[0],
                preferred_element_type=f32)
    for ph in range(1, PH):
        h = h + jnp.dot(pooled[ph * tn:(ph + 1) * tn].astype(bf16),
                        w1_ref[ph], preferred_element_type=f32)
    h = jnp.maximum(h + b1_ref[...], 0.0)                   # (TN, 128) f32

    # fc2 + ReLU, fc3 -- intermediates never leave vregs/VMEM.
    z = jnp.maximum(jnp.dot(h.astype(bf16), w2_ref[...],
                            preferred_element_type=f32) + b2_ref[...], 0.0)
    out = jnp.dot(z.astype(bf16), w3_ref[...],
                  preferred_element_type=f32) + b3_ref[...]
    o_ref[...] = out.astype(o_ref.dtype)                    # (TN, 128)


# ---------------------------------------------------------------------------
# Wrapper: repack x, pad batch, run a 1-D batch-tile grid, slice real logits.
# ---------------------------------------------------------------------------
@jax.jit
def cnn_forward(prep, x):
    # x: (N, 6, 14, 14) NCHW, exactly what the PyTorch forward() consumes.
    n = x.shape[0]
    n_pad = ((n + TILE_N - 1) // TILE_N) * TILE_N
    nb = n_pad // TILE_N
    if n_pad != n:
        x = jnp.concatenate(
            [x, jnp.zeros((n_pad - n,) + x.shape[1:], x.dtype)], axis=0)

    # Repack x -> (nb*2*5*TILE_N, 420):
    #   row  = bt*(2*5*TN) + dh*(5*TN) + ph*TN + t
    #   lane = i*84 + wr*42 + ww*6 + c
    #   value = x[bt*TN + t, c, 2*ph + dh + i, 2*ww + wr]
    rows_idx = (np.arange(2)[:, None, None]
                + 2 * np.arange(PH)[None, :, None]
                + np.arange(KH)[None, None, :])              # (dh, ph, i)
    xg = x[:, :, rows_idx, :]                                # (n_pad, c, dh, ph, i, w)
    xg = xg.reshape(n_pad, C_IN, 2, PH, KH, W_IN // 2, 2)    # ... (ww, wr)
    xg = xg.reshape(nb, TILE_N, C_IN, 2, PH, KH, W_IN // 2, 2)
    xg = xg.transpose(0, 3, 4, 1, 5, 7, 6, 2)                # (bt, dh, ph, t, i, wr, ww, c)
    xk = xg.reshape(nb * 2 * PH * TILE_N, K_CONV).astype(jnp.bfloat16)

    vec2 = lambda g: (0, 0)
    out = pl.pallas_call(
        _cnn_fused_kernel,
        out_shape=jax.ShapeDtypeStruct((n_pad, LANES), jnp.float32),
        grid_spec=pltpu.PrefetchScalarGridSpec(
            num_scalar_prefetch=0,
            grid=(nb,),
            in_specs=[
                pl.BlockSpec((2 * PH * TILE_N, K_CONV), lambda g: (g, 0)),
                pl.BlockSpec((K_CONV, 2 * LANES), vec2),
                pl.BlockSpec((1, LANES), vec2),
                pl.BlockSpec((PH, LANES, LANES), lambda g: (0, 0, 0)),
                pl.BlockSpec((1, LANES), vec2),
                pl.BlockSpec((LANES, LANES), vec2),
                pl.BlockSpec((1, LANES), vec2),
                pl.BlockSpec((LANES, LANES), vec2),
                pl.BlockSpec((1, LANES), vec2),
            ],
            out_specs=pl.BlockSpec((TILE_N, LANES), lambda g: (g, 0)),
        ),
        compiler_params=pltpu.CompilerParams(
            dimension_semantics=("parallel",)),
    )(xk, prep["conv_v"], prep["conv_b"],
      prep["fc1_w"], prep["fc1_b"],
      prep["fc2_w"], prep["fc2_b"],
      prep["fc3_w"], prep["fc3_b"])

    # Drop the padded batch rows and padded output lanes.
    return out[:n, :10]


# ---------------------------------------------------------------------------
# Parameter init (PyTorch layout) and one-time kernel-layout preparation.
# ---------------------------------------------------------------------------
def init_params(key):
    ks = jax.random.split(key, 10)

    def u(k, shape, fan_in):
        bound = 1.0 / jnp.sqrt(float(fan_in))
        return jax.random.uniform(k, shape, jnp.float32, -bound, bound)

    return {
        # conv1 is declared in __init__ but never used in forward();
        # initialized only for structural parity with the nn.Module.
        "conv1_w": u(ks[8], (6, 3, 5, 5), 3 * 5 * 5),
        "conv1_b": u(ks[9], (6,), 3 * 5 * 5),
        "conv2_w": u(ks[0], (16, 6, 5, 5), 6 * 5 * 5),
        "conv2_b": u(ks[1], (16,), 6 * 5 * 5),
        "fc1_w":   u(ks[2], (120, 400), 400),
        "fc1_b":   u(ks[3], (120,), 400),
        "fc2_w":   u(ks[4], (84, 120), 120),
        "fc2_b":   u(ks[5], (84,), 120),
        "fc3_w":   u(ks[6], (10, 84), 84),
        "fc3_b":   u(ks[7], (10,), 84),
    }


def prepare_params(params):
    """Fold im2col / pool-offset structure, the flatten permutation, the FC
    transposes and all lane padding into the weights once; store matmul
    operands in bf16 so the kernel only does dense 2-D bf16 GEMMs."""
    w2 = np.asarray(params["conv2_w"], np.float32)         # (16, 6, 5, 5)
    b2 = np.asarray(params["conv2_b"], np.float32)         # (16,)

    # V[(i, wr, ww, c), (dw, pw*16+co)] = conv2_w[co, c, i, j]
    #   where j = (2*ww + wr) - (2*pw + dw); zero when j is outside [0, 5).
    V = np.zeros((KH, 2, W_IN // 2, C_IN, 2, LANES), np.float32)
    for dw in range(2):
        for i in range(KH):
            for wr in range(2):
                for ww in range(W_IN // 2):
                    for pw in range(PW):
                        j = 2 * ww + wr - 2 * pw - dw
                        if 0 <= j < KW:
                            V[i, wr, ww, :, dw,
                              pw * C_OUT:(pw + 1) * C_OUT] = w2[:, :, i, j].T
    V = V.reshape(K_CONV, 2 * LANES)                        # (420, 256)

    conv_b = np.zeros((1, LANES), np.float32)
    conv_b[0, :PW * C_OUT] = np.tile(b2, PW)

    # fc1: torch flatten order is (co, ph, pw); our pooled lanes are (pw, co)
    # per ph row -> permute once and pad to (5, 128, 128).
    w1 = np.asarray(params["fc1_w"], np.float32).reshape(120, C_OUT, PH, PW)
    w1 = w1.transpose(2, 3, 1, 0).reshape(PH, PW * C_OUT, 120)
    W1 = np.zeros((PH, LANES, LANES), np.float32)
    W1[:, :PW * C_OUT, :120] = w1
    b1 = np.zeros((1, LANES), np.float32)
    b1[0, :120] = np.asarray(params["fc1_b"], np.float32)

    W2 = np.zeros((LANES, LANES), np.float32)
    W2[:120, :84] = np.asarray(params["fc2_w"], np.float32).T
    b2f = np.zeros((1, LANES), np.float32)
    b2f[0, :84] = np.asarray(params["fc2_b"], np.float32)

    W3 = np.zeros((LANES, LANES), np.float32)
    W3[:84, :10] = np.asarray(params["fc3_w"], np.float32).T
    b3f = np.zeros((1, LANES), np.float32)
    b3f[0, :10] = np.asarray(params["fc3_b"], np.float32)

    return {
        "conv_v": jnp.asarray(V, jnp.bfloat16),
        "conv_b": jnp.asarray(conv_b),
        "fc1_w": jnp.asarray(W1, jnp.bfloat16),
        "fc1_b": jnp.asarray(b1),
        "fc2_w": jnp.asarray(W2, jnp.bfloat16),
        "fc2_b": jnp.asarray(b2f),
        "fc3_w": jnp.asarray(W3, jnp.bfloat16),
        "fc3_b": jnp.asarray(b3f),
    }


# ---------------------------------------------------------------------------
# Pure-JAX reference (mirrors the PyTorch forward) for a correctness check.
# ---------------------------------------------------------------------------
def reference_forward(params, x):
    hp = jax.lax.Precision.HIGHEST
    y = jax.lax.conv_general_dilated(
        x, params["conv2_w"], window_strides=(1, 1), padding="VALID",
        dimension_numbers=("NCHW", "OIHW", "NCHW"), precision=hp)
    y = jnp.maximum(y + params["conv2_b"][None, :, None, None], 0.0)
    y = jax.lax.reduce_window(y, -jnp.inf, jax.lax.max,
                              (1, 1, 2, 2), (1, 1, 2, 2), "VALID")
    y = y.reshape(y.shape[0], -1)                            # NCHW flatten
    y = jnp.maximum(jnp.dot(y, params["fc1_w"].T, precision=hp)
                    + params["fc1_b"], 0.0)
    y = jnp.maximum(jnp.dot(y, params["fc2_w"].T, precision=hp)
                    + params["fc2_b"], 0.0)
    return jnp.dot(y, params["fc3_w"].T, precision=hp) + params["fc3_b"]


if __name__ == "__main__":
    key = jax.random.PRNGKey(0)
    pkey, xkey = jax.random.split(key)
    params = init_params(pkey)
    prep = prepare_params(params)

    # Input consistent with forward(): (batch=2, channels=6, spatial=14x14).
    x = jax.random.normal(xkey, (2, C_IN, H_IN, W_IN), jnp.float32)

    out = cnn_forward(prep, x)
    jax.block_until_ready(out)
    assert out.shape == (2, 10) and out.dtype == jnp.float32

    ref = reference_forward(params, x)
    err = float(jnp.max(jnp.abs(out - ref)))
    # bf16 matmul operands with f32 accumulation: comfortably within 5e-2.
    assert err < 5e-2, f"kernel/reference mismatch: max abs err = {err}"

    print("KERNEL_OK")
</pallas_src>

<mosaic_0001>
module attributes {stable_mosaic.version = 11 : i64} {
  func.func @_cnn_fused_kernel(%arg0: i32, %arg1: memref<80x420xbf16, #tpu.memory_space<vmem>>, %arg2: memref<420x256xbf16, #tpu.memory_space<vmem>>, %arg3: memref<1x128xf32, #tpu.memory_space<vmem>>, %arg4: memref<5x128x128xbf16, #tpu.memory_space<vmem>>, %arg5: memref<1x128xf32, #tpu.memory_space<vmem>>, %arg6: memref<128x128xbf16, #tpu.memory_space<vmem>>, %arg7: memref<1x128xf32, #tpu.memory_space<vmem>>, %arg8: memref<128x128xbf16, #tpu.memory_space<vmem>>, %arg9: memref<1x128xf32, #tpu.memory_space<vmem>>, %arg10: memref<8x128xf32, #tpu.memory_space<vmem>>) attributes {dimension_semantics = [#tpu.dimension_semantics<parallel>], iteration_bounds = array<i64: 1>, scalar_prefetch = 0 : i64, scratch_operands = 0 : i64, tpu.core_type = #tpu.core_type<tc>, window_params = [{transform_indices = @transform_0, window_bounds = array<i64: 80, 420>}, {pipeline_mode = #tpu.pipeline_mode<synchronous>, transform_indices = @transform_1, window_bounds = array<i64: 420, 256>}, {pipeline_mode = #tpu.pipeline_mode<synchronous>, transform_indices = @transform_2, window_bounds = array<i64: 1, 128>}, {pipeline_mode = #tpu.pipeline_mode<synchronous>, transform_indices = @transform_3, window_bounds = array<i64: 5, 128, 128>}, {pipeline_mode = #tpu.pipeline_mode<synchronous>, transform_indices = @transform_4, window_bounds = array<i64: 1, 128>}, {pipeline_mode = #tpu.pipeline_mode<synchronous>, transform_indices = @transform_5, window_bounds = array<i64: 128, 128>}, {pipeline_mode = #tpu.pipeline_mode<synchronous>, transform_indices = @transform_6, window_bounds = array<i64: 1, 128>}, {pipeline_mode = #tpu.pipeline_mode<synchronous>, transform_indices = @transform_7, window_bounds = array<i64: 128, 128>}, {pipeline_mode = #tpu.pipeline_mode<synchronous>, transform_indices = @transform_8, window_bounds = array<i64: 1, 128>}, {transform_indices = @transform_9, window_bounds = array<i64: 8, 128>}]} {
    %c0 = arith.constant 0 : index
    %c0_0 = arith.constant 0 : index
    %0 = vector.load %arg1[%c0, %c0_0] : memref<80x420xbf16, #tpu.memory_space<vmem>>, vector<80x420xbf16>
    %c0_1 = arith.constant 0 : index
    %c0_2 = arith.constant 0 : index
    %1 = vector.load %arg2[%c0_1, %c0_2] : memref<420x256xbf16, #tpu.memory_space<vmem>>, vector<420x256xbf16>
    %cst = arith.constant dense<0.000000e+00> : vector<80x256xf32>
    %2 = tpu.matmul %0, %1, %cst {dimension_numbers = #tpu.dot_dimension_numbers<[1], [0], [0], [1], [0, 0, 1, 1], [], []>} : vector<80x420xbf16>, vector<420x256xbf16>, vector<80x256xf32> -> vector<80x256xf32>
    %3 = vector.extract_strided_slice %2 {offsets = [0, 0], sizes = [40, 128], strides = [1, 1]} : vector<80x256xf32> to vector<40x128xf32>
    %4 = vector.extract_strided_slice %2 {offsets = [0, 128], sizes = [40, 128], strides = [1, 1]} : vector<80x256xf32> to vector<40x128xf32>
    %5 = arith.maximumf %3, %4 : vector<40x128xf32>
    %6 = vector.extract_strided_slice %2 {offsets = [40, 0], sizes = [40, 128], strides = [1, 1]} : vector<80x256xf32> to vector<40x128xf32>
    %7 = vector.extract_strided_slice %2 {offsets = [40, 128], sizes = [40, 128], strides = [1, 1]} : vector<80x256xf32> to vector<40x128xf32>
    %8 = arith.maximumf %6, %7 : vector<40x128xf32>
    %9 = arith.maximumf %5, %8 : vector<40x128xf32>
    %c0_3 = arith.constant 0 : index
    %c0_4 = arith.constant 0 : index
    %10 = vector.load %arg3[%c0_3, %c0_4] : memref<1x128xf32, #tpu.memory_space<vmem>>, vector<1x128xf32>
    %11 = vector.broadcast %10 : vector<1x128xf32> to vector<40x128xf32>
    %12 = arith.addf %9, %11 : vector<40x128xf32>
    %cst_5 = arith.constant 0.000000e+00 : f32
    %13 = vector.broadcast %cst_5 : f32 to vector<40x128xf32>
    %14 = arith.maximumf %12, %13 : vector<40x128xf32>
    %15 = vector.extract_strided_slice %14 {offsets = [0, 0], sizes = [8, 128], strides = [1, 1]} : vector<40x128xf32> to vector<8x128xf32>
    %16 = arith.truncf %15 : vector<8x128xf32> to vector<8x128xbf16>
    %c0_6 = arith.constant 0 : index
    %c0_7 = arith.constant 0 : index
    %c0_8 = arith.constant 0 : index
    %17 = vector.load %arg4[%c0_6, %c0_7, %c0_8] : memref<5x128x128xbf16, #tpu.memory_space<vmem>>, vector<1x128x128xbf16>
    %18 = vector.shape_cast %17 : vector<1x128x128xbf16> to vector<128x128xbf16>
    %cst_9 = arith.constant dense<0.000000e+00> : vector<8x128xf32>
    %19 = tpu.matmul %16, %18, %cst_9 {dimension_numbers = #tpu.dot_dimension_numbers<[1], [0], [0], [1], [0, 0, 1, 1], [], []>} : vector<8x128xbf16>, vector<128x128xbf16>, vector<8x128xf32> -> vector<8x128xf32>
    %20 = vector.extract_strided_slice %14 {offsets = [8, 0], sizes = [8, 128], strides = [1, 1]} : vector<40x128xf32> to vector<8x128xf32>
    %21 = arith.truncf %20 : vector<8x128xf32> to vector<8x128xbf16>
    %c1 = arith.constant 1 : index
    %c0_10 = arith.constant 0 : index
    %c0_11 = arith.constant 0 : index
    %22 = vector.load %arg4[%c1, %c0_10, %c0_11] : memref<5x128x128xbf16, #tpu.memory_space<vmem>>, vector<1x128x128xbf16>
    %23 = vector.shape_cast %22 : vector<1x128x128xbf16> to vector<128x128xbf16>
    %cst_12 = arith.constant dense<0.000000e+00> : vector<8x128xf32>
    %24 = tpu.matmul %21, %23, %cst_12 {dimension_numbers = #tpu.dot_dimension_numbers<[1], [0], [0], [1], [0, 0, 1, 1], [], []>} : vector<8x128xbf16>, vector<128x128xbf16>, vector<8x128xf32> -> vector<8x128xf32>
    %25 = arith.addf %19, %24 : vector<8x128xf32>
    %26 = vector.extract_strided_slice %14 {offsets = [16, 0], sizes = [8, 128], strides = [1, 1]} : vector<40x128xf32> to vector<8x128xf32>
    %27 = arith.truncf %26 : vector<8x128xf32> to vector<8x128xbf16>
    %c2 = arith.constant 2 : index
    %c0_13 = arith.constant 0 : index
    %c0_14 = arith.constant 0 : index
    %28 = vector.load %arg4[%c2, %c0_13, %c0_14] : memref<5x128x128xbf16, #tpu.memory_space<vmem>>, vector<1x128x128xbf16>
    %29 = vector.shape_cast %28 : vector<1x128x128xbf16> to vector<128x128xbf16>
    %cst_15 = arith.constant dense<0.000000e+00> : vector<8x128xf32>
    %30 = tpu.matmul %27, %29, %cst_15 {dimension_numbers = #tpu.dot_dimension_numbers<[1], [0], [0], [1], [0, 0, 1, 1], [], []>} : vector<8x128xbf16>, vector<128x128xbf16>, vector<8x128xf32> -> vector<8x128xf32>
    %31 = arith.addf %25, %30 : vector<8x128xf32>
    %32 = vector.extract_strided_slice %14 {offsets = [24, 0], sizes = [8, 128], strides = [1, 1]} : vector<40x128xf32> to vector<8x128xf32>
    %33 = arith.truncf %32 : vector<8x128xf32> to vector<8x128xbf16>
    %c3 = arith.constant 3 : index
    %c0_16 = arith.constant 0 : index
    %c0_17 = arith.constant 0 : index
    %34 = vector.load %arg4[%c3, %c0_16, %c0_17] : memref<5x128x128xbf16, #tpu.memory_space<vmem>>, vector<1x128x128xbf16>
    %35 = vector.shape_cast %34 : vector<1x128x128xbf16> to vector<128x128xbf16>
    %cst_18 = arith.constant dense<0.000000e+00> : vector<8x128xf32>
    %36 = tpu.matmul %33, %35, %cst_18 {dimension_numbers = #tpu.dot_dimension_numbers<[1], [0], [0], [1], [0, 0, 1, 1], [], []>} : vector<8x128xbf16>, vector<128x128xbf16>, vector<8x128xf32> -> vector<8x128xf32>
    %37 = arith.addf %31, %36 : vector<8x128xf32>
    %38 = vector.extract_strided_slice %14 {offsets = [32, 0], sizes = [8, 128], strides = [1, 1]} : vector<40x128xf32> to vector<8x128xf32>
    %39 = arith.truncf %38 : vector<8x128xf32> to vector<8x128xbf16>
    %c4 = arith.constant 4 : index
    %c0_19 = arith.constant 0 : index
    %c0_20 = arith.constant 0 : index
    %40 = vector.load %arg4[%c4, %c0_19, %c0_20] : memref<5x128x128xbf16, #tpu.memory_space<vmem>>, vector<1x128x128xbf16>
    %41 = vector.shape_cast %40 : vector<1x128x128xbf16> to vector<128x128xbf16>
    %cst_21 = arith.constant dense<0.000000e+00> : vector<8x128xf32>
    %42 = tpu.matmul %39, %41, %cst_21 {dimension_numbers = #tpu.dot_dimension_numbers<[1], [0], [0], [1], [0, 0, 1, 1], [], []>} : vector<8x128xbf16>, vector<128x128xbf16>, vector<8x128xf32> -> vector<8x128xf32>
    %43 = arith.addf %37, %42 : vector<8x128xf32>
    %c0_22 = arith.constant 0 : index
    %c0_23 = arith.constant 0 : index
    %44 = vector.load %arg5[%c0_22, %c0_23] : memref<1x128xf32, #tpu.memory_space<vmem>>, vector<1x128xf32>
    %45 = vector.broadcast %44 : vector<1x128xf32> to vector<8x128xf32>
    %46 = arith.addf %43, %45 : vector<8x128xf32>
    %cst_24 = arith.constant 0.000000e+00 : f32
    %47 = vector.broadcast %cst_24 : f32 to vector<8x128xf32>
    %48 = arith.maximumf %46, %47 : vector<8x128xf32>
    %49 = arith.truncf %48 : vector<8x128xf32> to vector<8x128xbf16>
    %c0_25 = arith.constant 0 : index
    %c0_26 = arith.constant 0 : index
    %50 = vector.load %arg6[%c0_25, %c0_26] : memref<128x128xbf16, #tpu.memory_space<vmem>>, vector<128x128xbf16>
    %cst_27 = arith.constant dense<0.000000e+00> : vector<8x128xf32>
    %51 = tpu.matmul %49, %50, %cst_27 {dimension_numbers = #tpu.dot_dimension_numbers<[1], [0], [0], [1], [0, 0, 1, 1], [], []>} : vector<8x128xbf16>, vector<128x128xbf16>, vector<8x128xf32> -> vector<8x128xf32>
    %c0_28 = arith.constant 0 : index
    %c0_29 = arith.constant 0 : index
    %52 = vector.load %arg7[%c0_28, %c0_29] : memref<1x128xf32, #tpu.memory_space<vmem>>, vector<1x128xf32>
    %53 = vector.broadcast %52 : vector<1x128xf32> to vector<8x128xf32>
    %54 = arith.addf %51, %53 : vector<8x128xf32>
    %cst_30 = arith.constant 0.000000e+00 : f32
    %55 = vector.broadcast %cst_30 : f32 to vector<8x128xf32>
    %56 = arith.maximumf %54, %55 : vector<8x128xf32>
    %57 = arith.truncf %56 : vector<8x128xf32> to vector<8x128xbf16>
    %c0_31 = arith.constant 0 : index
    %c0_32 = arith.constant 0 : index
    %58 = vector.load %arg8[%c0_31, %c0_32] : memref<128x128xbf16, #tpu.memory_space<vmem>>, vector<128x128xbf16>
    %cst_33 = arith.constant dense<0.000000e+00> : vector<8x128xf32>
    %59 = tpu.matmul %57, %58, %cst_33 {dimension_numbers = #tpu.dot_dimension_numbers<[1], [0], [0], [1], [0, 0, 1, 1], [], []>} : vector<8x128xbf16>, vector<128x128xbf16>, vector<8x128xf32> -> vector<8x128xf32>
    %c0_34 = arith.constant 0 : index
    %c0_35 = arith.constant 0 : index
    %60 = vector.load %arg9[%c0_34, %c0_35] : memref<1x128xf32, #tpu.memory_space<vmem>>, vector<1x128xf32>
    %61 = vector.broadcast %60 : vector<1x128xf32> to vector<8x128xf32>
    %62 = arith.addf %59, %61 : vector<8x128xf32>
    %c0_36 = arith.constant 0 : index
    %c0_37 = arith.constant 0 : index
    %63 = vector.load %arg10[%c0_36, %c0_37] : memref<8x128xf32, #tpu.memory_space<vmem>>, vector<8x128xf32>
    tpu.vector_store %arg10[%c0_36, %c0_37], %62 {strides = array<i32>} : memref<8x128xf32, #tpu.memory_space<vmem>>, vector<8x128xf32>,
    return
  }
  func.func @transform_0(%arg0: i32) -> (i32, i32) {
    %c0_i32 = arith.constant 0 : i32
    %c0_i32_0 = arith.constant 0 : i32
    return %arg0, %c0_i32 : i32, i32
  }
  func.func @transform_1(%arg0: i32) -> (i32, i32) {
    %c0_i32 = arith.constant 0 : i32
    %c0_i32_0 = arith.constant 0 : i32
    %c0_i32_1 = arith.constant 0 : i32
    return %c0_i32, %c0_i32_0 : i32, i32
  }
  func.func @transform_2(%arg0: i32) -> (i32, i32) {
    %c0_i32 = arith.constant 0 : i32
    %c0_i32_0 = arith.constant 0 : i32
    %c0_i32_1 = arith.constant 0 : i32
    return %c0_i32, %c0_i32_0 : i32, i32
  }
  func.func @transform_3(%arg0: i32) -> (i32, i32, i32) {
    %c0_i32 = arith.constant 0 : i32
    %c0_i32_0 = arith.constant 0 : i32
    %c0_i32_1 = arith.constant 0 : i32
    %c0_i32_2 = arith.constant 0 : i32
    return %c0_i32, %c0_i32_0, %c0_i32_1 : i32, i32, i32
  }
  func.func @transform_4(%arg0: i32) -> (i32, i32) {
    %c0_i32 = arith.constant 0 : i32
    %c0_i32_0 = arith.constant 0 : i32
    %c0_i32_1 = arith.constant 0 : i32
    return %c0_i32, %c0_i32_0 : i32, i32
  }
  func.func @transform_5(%arg0: i32) -> (i32, i32) {
    %c0_i32 = arith.constant 0 : i32
    %c0_i32_0 = arith.constant 0 : i32
    %c0_i32_1 = arith.constant 0 : i32
    return %c0_i32, %c0_i32_0 : i32, i32
  }
  func.func @transform_6(%arg0: i32) -> (i32, i32) {
    %c0_i32 = arith.constant 0 : i32
    %c0_i32_0 = arith.constant 0 : i32
    %c0_i32_1 = arith.constant 0 : i32
    return %c0_i32, %c0_i32_0 : i32, i32
  }
  func.func @transform_7(%arg0: i32) -> (i32, i32) {
    %c0_i32 = arith.constant 0 : i32
    %c0_i32_0 = arith.constant 0 : i32
    %c0_i32_1 = arith.constant 0 : i32
    return %c0_i32, %c0_i32_0 : i32, i32
  }
  func.func @transform_8(%arg0: i32) -> (i32, i32) {
    %c0_i32 = arith.constant 0 : i32
    %c0_i32_0 = arith.constant 0 : i32
    %c0_i32_1 = arith.constant 0 : i32
    return %c0_i32, %c0_i32_0 : i32, i32
  }
  func.func @transform_9(%arg0: i32) -> (i32, i32) {
    %c0_i32 = arith.constant 0 : i32
    %c0_i32_0 = arith.constant 0 : i32
    return %arg0, %c0_i32 : i32, i32
  }
}

</mosaic_0001>

<llo_original>
// kernel: cnn_forward.1
$region0: #{cnn_forward.1}
  #allocation0 [shape = 'u32[]', space=smem, size = 0x4, offset = 0x4, fixed_abs, tag = 'smem constant byte address 0x4 - core index']
  #allocation1 [shape = 'u32[144,128]{1,0:T(1,128)}', space=vmem, size = 0x12000, scoped, tag = 'internal scratch']
  %s0 = inlined_call_operand.vmem [shape: bf16[80,420], index: 0, kind: input, shape index: {}]
  %s1 = inlined_call_operand.vmem [shape: bf16[420,256], index: 1, kind: input, shape index: {}]
  %s2 = inlined_call_operand.vmem [shape: f32[1,128], index: 2, kind: input, shape index: {}]
  %s3 = inlined_call_operand.vmem [shape: bf16[5,128,128], index: 3, kind: input, shape index: {}]
  %s4 = inlined_call_operand.vmem [shape: f32[1,128], index: 4, kind: input, shape index: {}]
  %s5 = inlined_call_operand.vmem [shape: bf16[128,128], index: 5, kind: input, shape index: {}]
  %s6 = inlined_call_operand.vmem [shape: f32[1,128], index: 6, kind: input, shape index: {}]
  %s7 = inlined_call_operand.vmem [shape: bf16[128,128], index: 7, kind: input, shape index: {}]
  %s8 = inlined_call_operand.vmem [shape: f32[1,128], index: 8, kind: input, shape index: {}]
  %s9 = inlined_call_operand.vmem [shape: f32[8,128], index: 9, kind: output, shape index: {}]
  %s10 = sld [smem:[#allocation0]]
  $region46: #{cnn_forward.1} parent=0
    _
  %s12 = ssub.s32 1, %s10
  %s13 = scalar_select 0, %s12, %s10
  // Predicated region
  $region2: #{cnn_forward.1} parent=0 // pred_check
    _
  $region3: #{cnn_forward.1} parent=0 // pred_check_branch
    %15 = sbr.rel (0) target = $region5
  $region4: #{cnn_forward.1} parent=0 // pred_region
    _
  $region5: #{cnn_forward.1} parent=0 // pred_fallthru
    _
  // Predicated region
  $region6: #{cnn_forward.1} parent=0 // pred_check
    _
  $region7: #{cnn_forward.1} parent=0 // pred_check_branch
    %17 = sbr.rel (0) target = $region9
  $region8: #{cnn_forward.1} parent=0 // pred_region
    _
  $region9: #{cnn_forward.1} parent=0 // pred_fallthru
    _
  // Predicated region
  $region10: #{cnn_forward.1} parent=0 // pred_check
    _
  $region11: #{cnn_forward.1} parent=0 // pred_check_branch
    %19 = sbr.rel (0) target = $region13
  $region12: #{cnn_forward.1} parent=0 // pred_region
    _
  $region13: #{cnn_forward.1} parent=0 // pred_fallthru
    _
  // Predicated region
  $region14: #{cnn_forward.1} parent=0 // pred_check
    _
  $region15: #{cnn_forward.1} parent=0 // pred_check_branch
    %21 = sbr.rel (0) target = $region17
  $region16: #{cnn_forward.1} parent=0 // pred_region
    _
  $region17: #{cnn_forward.1} parent=0 // pred_fallthru
    _
  // Predicated region
  $region18: #{cnn_forward.1} parent=0 // pred_check
    _
  $region19: #{cnn_forward.1} parent=0 // pred_check_branch
    %23 = sbr.rel (0) target = $region21
  $region20: #{cnn_forward.1} parent=0 // pred_region
    _
  $region21: #{cnn_forward.1} parent=0 // pred_fallthru
    _
  // Predicated region
  $region22: #{cnn_forward.1} parent=0 // pred_check
    _
  $region23: #{cnn_forward.1} parent=0 // pred_check_branch
    %25 = sbr.rel (0) target = $region25
  $region24: #{cnn_forward.1} parent=0 // pred_region
    _
  $region25: #{cnn_forward.1} parent=0 // pred_fallthru
    _
  // Predicated region
  $region26: #{cnn_forward.1} parent=0 // pred_check
    _
  $region27: #{cnn_forward.1} parent=0 // pred_check_branch
    %27 = sbr.rel (0) target = $region29
  $region28: #{cnn_forward.1} parent=0 // pred_region
    _
  $region29: #{cnn_forward.1} parent=0 // pred_fallthru
    _
  // Predicated region
  $region30: #{cnn_forward.1} parent=0 // pred_check
    _
  $region31: #{cnn_forward.1} parent=0 // pred_check_branch
    %29 = sbr.rel (0) target = $region33
  $region32: #{cnn_forward.1} parent=0 // pred_region
    _
  $region33: #{cnn_forward.1} parent=0 // pred_fallthru
    _
  // Predicated region
  $region34: #{cnn_forward.1} parent=0 // pred_check
    _
  $region35: #{cnn_forward.1} parent=0 // pred_check_branch
    %31 = sbr.rel (0) target = $region37
  $region36: #{cnn_forward.1} parent=0 // pred_region
    _
  $region37: #{cnn_forward.1} parent=0 // pred_fallthru
    _
  %v33 = vld [vmem:[%s0] sm:$0xff]
  %v34 = vld [vmem:[%s0 + $0x8] sm:$0xff]
  %v35 = vld [vmem:[%s0 + $0x10] sm:$0xff]
  %v36 = vld [vmem:[%s0 + $0x18] sm:$0xff]
  %v37 = vld [vmem:[%s0 + $0x20] sm:$0xff]
  %v38 = vld [vmem:[%s0 + $0x28] sm:$0xff]
  %v39 = vld [vmem:[%s0 + $0x30] sm:$0xff]
  %v40 = vld [vmem:[%s0 + $0x38] sm:$0xff]
  %v41 = vld [vmem:[%s0 + $0x40] sm:$0xff]
  %v42 = vld [vmem:[%s0 + $0x48] sm:$0xff]
  %v43 = vld [vmem:[%s0 + $0x50] sm:$0xff]
  %v44 = vld [vmem:[%s0 + $0x58] sm:$0xff]
  %v45 = vld [vmem:[%s0 + $0x60] sm:$0xff]
  %v46 = vld [vmem:[%s0 + $0x68] sm:$0xff]
  %v47 = vld [vmem:[%s0 + $0x70] sm:$0xff]
  %v48 = vld [vmem:[%s0 + $0x78] sm:$0xff]
  %v49 = vld [vmem:[%s0 + $0x80] sm:$0xff]
  %v50 = vld [vmem:[%s0 + $0x88] sm:$0xff]
  %v51 = vld [vmem:[%s0 + $0x90] sm:$0xff]
  %v52 = vld [vmem:[%s0 + $0x98] sm:$0xff]
  %v53 = vld [vmem:[%s1] sm:$0xff]
  %v54 = vld [vmem:[%s1 + $0x8] sm:$0xff]
  %v55 = vld [vmem:[%s1 + $0x10] sm:$0xff]
  %v56 = vld [vmem:[%s1 + $0x18] sm:$0xff]
  %v57 = vld [vmem:[%s1 + $0x20] sm:$0xff]
  %v58 = vld [vmem:[%s1 + $0x28] sm:$0xff]
  %v59 = vld [vmem:[%s1 + $0x30] sm:$0xff]
  %v60 = vld [vmem:[%s1 + $0x38] sm:$0xff]
  %v61 = vld [vmem:[%s1 + $0x40] sm:$0xff]
  %v62 = vld [vmem:[%s1 + $0x48] sm:$0xff]
  %v63 = vld [vmem:[%s1 + $0x50] sm:$0xff]
  %v64 = vld [vmem:[%s1 + $0x58] sm:$0xff]
  %v65 = vld [vmem:[%s1 + $0x60] sm:$0xff]
  %v66 = vld [vmem:[%s1 + $0x68] sm:$0xff]
  %v67 = vld [vmem:[%s1 + $0x70] sm:$0xff]
  %v68 = vld [vmem:[%s1 + $0x78] sm:$0xff]
  %v69 = vld [vmem:[%s1 + $0x80] sm:$0xff]
  %v70 = vld [vmem:[%s1 + $0x88] sm:$0xff]
  %v71 = vld [vmem:[%s1 + $0x90] sm:$0xff]
  %v72 = vld [vmem:[%s1 + $0x98] sm:$0xff]
  %v73 = vld [vmem:[%s1 + $0xa0] sm:$0xff]
  %v74 = vld [vmem:[%s1 + $0xa8] sm:$0xff]
  %v75 = vld [vmem:[%s1 + $0xb0] sm:$0xff]
  %v76 = vld [vmem:[%s1 + $0xb8] sm:$0xff]
  %v77 = vld [vmem:[%s1 + $0xc0] sm:$0xff]
  %v78 = vld [vmem:[%s1 + $0xc8] sm:$0xff]
  %v79 = vld [vmem:[%s1 + $0xd0] sm:$0xff]
  %v80 = vld [vmem:[%s1 + $0xd8] sm:$0xff]
  %v81 = vld [vmem:[%s1 + $0xe0] sm:$0xff]
  %v82 = vld [vmem:[%s1 + $0xe8] sm:$0xff]
  %v83 = vld [vmem:[%s1 + $0xf0] sm:$0xff]
  %v84 = vld [vmem:[%s1 + $0xf8] sm:$0xff]
  %v85 = vld [vmem:[%s1 + $0x100] sm:$0xff]
  %v86 = vld [vmem:[%s1 + $0x108] sm:$0xff]
  %v87 = vld [vmem:[%s1 + $0x110] sm:$0xff]
  %v88 = vld [vmem:[%s1 + $0x118] sm:$0xff]
  %v89 = vld [vmem:[%s1 + $0x120] sm:$0xff]
  %v90 = vld [vmem:[%s1 + $0x128] sm:$0xff]
  %v91 = vld [vmem:[%s1 + $0x130] sm:$0xff]
  %v92 = vld [vmem:[%s1 + $0x138] sm:$0xff]
  %v93 = vld [vmem:[%s1 + $0x140] sm:$0xff]
  %v94 = vld [vmem:[%s1 + $0x148] sm:$0xff]
  %v95 = vld [vmem:[%s1 + $0x150] sm:$0xff]
  %v96 = vld [vmem:[%s1 + $0x158] sm:$0xff]
  %v97 = vld [vmem:[%s1 + $0x160] sm:$0xff]
  %v98 = vld [vmem:[%s1 + $0x168] sm:$0xff]
  %v99 = vld [vmem:[%s1 + $0x170] sm:$0xff]
  %v100 = vld [vmem:[%s1 + $0x178] sm:$0xff]
  %v101 = vld [vmem:[%s1 + $0x180] sm:$0xff]
  %v102 = vld [vmem:[%s1 + $0x188] sm:$0xff]
  %v103 = vld [vmem:[%s1 + $0x190] sm:$0xff]
  %v104 = vld [vmem:[%s1 + $0x198] sm:$0xff]
  %v105 = vld [vmem:[%s1 + $0x1a0] sm:$0x33]
  %v126 = vunpack.c.l.b16 %v33
  %v127 = vunpack.c.h.b16 %v33
  %v128 = vunpack.c.l.b16 %v34
  %v129 = vunpack.c.h.b16 %v34
  %v130 = vunpack.c.l.b16 %v35
  %v131 = vunpack.c.h.b16 %v35
  %v132 = vunpack.c.l.b16 %v36
  %v133 = vunpack.c.h.b16 %v36
  %v134 = vunpack.c.l.b16 %v37
  %v135 = vunpack.c.h.b16 %v37
  %v136 = vunpack.c.l.b16 %v38
  %v137 = vunpack.c.h.b16 %v38
  %v138 = vunpack.c.l.b16 %v39
  %v139 = vunpack.c.h.b16 %v39
  %v140 = vunpack.c.l.b16 %v40
  %v141 = vunpack.c.h.b16 %v40
  %v142 = vunpack.c.l.b16 %v41
  %v143 = vunpack.c.h.b16 %v41
  %v144 = vunpack.c.l.b16 %v42
  %v145 = vunpack.c.h.b16 %v42
  %v146 = vunpack.c.l.b16 %v43
  %v147 = vunpack.c.h.b16 %v43
  %v148 = vunpack.c.l.b16 %v44
  %v149 = vunpack.c.h.b16 %v44
  %v150 = vunpack.c.l.b16 %v45
  %v151 = vunpack.c.h.b16 %v45
  %v152 = vunpack.c.l.b16 %v46
  %v153 = vunpack.c.h.b16 %v46
  %v154 = vunpack.c.l.b16 %v47
  %v155 = vunpack.c.h.b16 %v47
  %v156 = vunpack.c.l.b16 %v48
  %v157 = vunpack.c.h.b16 %v48
  %v158 = vunpack.c.l.b16 %v49
  %v159 = vunpack.c.h.b16 %v49
  %v160 = vunpack.c.l.b16 %v50
  %v161 = vunpack.c.h.b16 %v50
  %v162 = vunpack.c.l.b16 %v51
  %v163 = vunpack.c.h.b16 %v51
  %v164 = vunpack.c.l.b16 %v52
  %v165 = vunpack.c.h.b16 %v52
  %v166 = vpack.c.b16 %v130, %v126
  %v167 = vpack.c.b16 %v131, %v127
  %v168 = vpack.c.b16 %v132, %v128
  %v169 = vpack.c.b16 %v133, %v129
  %v170 = vpack.c.b16 %v138, %v134
  %v171 = vpack.c.b16 %v139, %v135
  %v172 = vpack.c.b16 %v140, %v136
  %v173 = vpack.c.b16 %v141, %v137
  %v174 = vpack.c.b16 %v146, %v142
  %v175 = vpack.c.b16 %v147, %v143
  %v176 = vpack.c.b16 %v148, %v144
  %v177 = vpack.c.b16 %v149, %v145
  %v178 = vpack.c.b16 %v154, %v150
  %v179 = vpack.c.b16 %v155, %v151
  %v180 = vpack.c.b16 %v156, %v152
  %v181 = vpack.c.b16 %v157, %v153
  %v182 = vpack.c.b16 %v162, %v158
  %v183 = vpack.c.b16 %v163, %v159
  %v184 = vpack.c.b16 %v164, %v160
  %v185 = vpack.c.b16 %v165, %v161
  %v254 = vunpack.c.l.b16 %v53
  %v255 = vunpack.c.h.b16 %v53
  %v256 = vunpack.c.l.b16 %v54
  %v257 = vunpack.c.h.b16 %v54
  %v258 = vunpack.c.l.b16 %v55
  %v259 = vunpack.c.h.b16 %v55
  %v260 = vunpack.c.l.b16 %v56
  %v261 = vunpack.c.h.b16 %v56
  %v262 = vunpack.c.l.b16 %v57
  %v263 = vunpack.c.h.b16 %v57
  %v264 = vunpack.c.l.b16 %v58
  %v265 = vunpack.c.h.b16 %v58
  %v266 = vunpack.c.l.b16 %v59
  %v267 = vunpack.c.h.b16 %v59
  %v268 = vunpack.c.l.b16 %v60
  %v269 = vunpack.c.h.b16 %v60
  %v270 = vunpack.c.l.b16 %v61
  %v271 = vunpack.c.h.b16 %v61
  %v272 = vunpack.c.l.b16 %v62
  %v273 = vunpack.c.h.b16 %v62
  %v274 = vunpack.c.l.b16 %v63
  %v275 = vunpack.c.h.b16 %v63
  %v276 = vunpack.c.l.b16 %v64
  %v277 = vunpack.c.h.b16 %v64
  %v278 = vunpack.c.l.b16 %v65
  %v279 = vunpack.c.h.b16 %v65
  %v280 = vunpack.c.l.b16 %v66
  %v281 = vunpack.c.h.b16 %v66
  %v282 = vunpack.c.l.b16 %v67
  %v283 = vunpack.c.h.b16 %v67
  %v284 = vunpack.c.l.b16 %v68
  %v285 = vunpack.c.h.b16 %v68
  %v286 = vunpack.c.l.b16 %v69
  %v287 = vunpack.c.h.b16 %v69
  %v288 = vunpack.c.l.b16 %v70
  %v289 = vunpack.c.h.b16 %v70
  %v290 = vunpack.c.l.b16 %v71
  %v291 = vunpack.c.h.b16 %v71
  %v292 = vunpack.c.l.b16 %v72
  %v293 = vunpack.c.h.b16 %v72
  %v294 = vunpack.c.l.b16 %v73
  %v295 = vunpack.c.h.b16 %v73
  %v296 = vunpack.c.l.b16 %v74
  %v297 = vunpack.c.h.b16 %v74
  %v298 = vunpack.c.l.b16 %v75
  %v299 = vunpack.c.h.b16 %v75
  %v300 = vunpack.c.l.b16 %v76
  %v301 = vunpack.c.h.b16 %v76
  %v302 = vunpack.c.l.b16 %v77
  %v303 = vunpack.c.h.b16 %v77
  %v304 = vunpack.c.l.b16 %v78
  %v305 = vunpack.c.h.b16 %v78
  %v306 = vunpack.c.l.b16 %v79
  %v307 = vunpack.c.h.b16 %v79
  %v308 = vunpack.c.l.b16 %v80
  %v309 = vunpack.c.h.b16 %v80
  %v310 = vunpack.c.l.b16 %v81
  %v311 = vunpack.c.h.b16 %v81
  %v312 = vunpack.c.l.b16 %v82
  %v313 = vunpack.c.h.b16 %v82
  %v314 = vunpack.c.l.b16 %v83
  %v315 = vunpack.c.h.b16 %v83
  %v316 = vunpack.c.l.b16 %v84
  %v317 = vunpack.c.h.b16 %v84
  %v318 = vunpack.c.l.b16 %v85
  %v319 = vunpack.c.h.b16 %v85
  %v320 = vunpack.c.l.b16 %v86
  %v321 = vunpack.c.h.b16 %v86
  %v322 = vunpack.c.l.b16 %v87
  %v323 = vunpack.c.h.b16 %v87
  %v324 = vunpack.c.l.b16 %v88
  %v325 = vunpack.c.h.b16 %v88
  %v326 = vunpack.c.l.b16 %v89
  %v327 = vunpack.c.h.b16 %v89
  %v328 = vunpack.c.l.b16 %v90
  %v329 = vunpack.c.h.b16 %v90
  %v330 = vunpack.c.l.b16 %v91
  %v331 = vunpack.c.h.b16 %v91
  %v332 = vunpack.c.l.b16 %v92
  %v333 = vunpack.c.h.b16 %v92
  %v334 = vunpack.c.l.b16 %v93
  %v335 = vunpack.c.h.b16 %v93
  %v336 = vunpack.c.l.b16 %v94
  %v337 = vunpack.c.h.b16 %v94
  %v338 = vunpack.c.l.b16 %v95
  %v339 = vunpack.c.h.b16 %v95
  %v340 = vunpack.c.l.b16 %v96
  %v341 = vunpack.c.h.b16 %v96
  %v342 = vunpack.c.l.b16 %v97
  %v343 = vunpack.c.h.b16 %v97
  %v344 = vunpack.c.l.b16 %v98
  %v345 = vunpack.c.h.b16 %v98
  %v346 = vunpack.c.l.b16 %v99
  %v347 = vunpack.c.h.b16 %v99
  %v348 = vunpack.c.l.b16 %v100
  %v349 = vunpack.c.h.b16 %v100
  %v350 = vunpack.c.l.b16 %v101
  %v351 = vunpack.c.h.b16 %v101
  %v352 = vunpack.c.l.b16 %v102
  %v353 = vunpack.c.h.b16 %v102
  %v354 = vunpack.c.l.b16 %v103
  %v355 = vunpack.c.h.b16 %v103
  %v356 = vunpack.c.l.b16 %v104
  %v357 = vunpack.c.h.b16 %v104
  %v358 = vunpack.c.l.b16 %v105
  %v359 = vunpack.c.h.b16 %v105
  %v360 = vpack.c.b16 %v256, %v254
  %v361 = vpack.c.b16 %v257, %v255
  %v362 = vpack.c.b16 %v260, %v258
  %v363 = vpack.c.b16 %v261, %v259
  %v364 = vpack.c.b16 %v264, %v262
  %v365 = vpack.c.b16 %v265, %v263
  %v366 = vpack.c.b16 %v268, %v266
  %v367 = vpack.c.b16 %v269, %v267
  %v368 = vpack.c.b16 %v272, %v270
  %v369 = vpack.c.b16 %v273, %v271
  %v370 = vpack.c.b16 %v276, %v274
  %v371 = vpack.c.b16 %v277, %v275
  %v372 = vpack.c.b16 %v280, %v278
  %v373 = vpack.c.b16 %v281, %v279
  %v374 = vpack.c.b16 %v284, %v282
  %v375 = vpack.c.b16 %v285, %v283
  %v376 = vpack.c.b16 %v288, %v286
  %v377 = vpack.c.b16 %v289, %v287
  %v378 = vpack.c.b16 %v292, %v290
  %v379 = vpack.c.b16 %v293, %v291
  %v380 = vpack.c.b16 %v296, %v294
  %v381 = vpack.c.b16 %v297, %v295
  %v382 = vpack.c.b16 %v300, %v298
  %v383 = vpack.c.b16 %v301, %v299
  %v384 = vpack.c.b16 %v304, %v302
  %v385 = vpack.c.b16 %v305, %v303
  %v386 = vpack.c.b16 %v308, %v306
  %v387 = vpack.c.b16 %v309, %v307
  %v388 = vpack.c.b16 %v312, %v310
  %v389 = vpack.c.b16 %v313, %v311
  %v390 = vpack.c.b16 %v316, %v314
  %v391 = vpack.c.b16 %v317, %v315
  %v392 = vpack.c.b16 %v320, %v318
  %v393 = vpack.c.b16 %v321, %v319
  %v394 = vpack.c.b16 %v324, %v322
  %v395 = vpack.c.b16 %v325, %v323
  %v396 = vpack.c.b16 %v328, %v326
  %v397 = vpack.c.b16 %v329, %v327
  %v398 = vpack.c.b16 %v332, %v330
  %v399 = vpack.c.b16 %v333, %v331
  %v400 = vpack.c.b16 %v336, %v334
  %v401 = vpack.c.b16 %v337, %v335
  %v402 = vpack.c.b16 %v340, %v338
  %v403 = vpack.c.b16 %v341, %v339
  %v404 = vpack.c.b16 %v344, %v342
  %v405 = vpack.c.b16 %v345, %v343
  %v406 = vpack.c.b16 %v348, %v346
  %v407 = vpack.c.b16 %v349, %v347
  %v408 = vpack.c.b16 %v352, %v350
  %v409 = vpack.c.b16 %v353, %v351
  %v410 = vpack.c.b16 %v356, %v354
  %v411 = vpack.c.b16 %v357, %v355
  %v412 = vpack.c.b16 %v358, %v358
  %v413 = vpack.c.b16 %v359, %v359
  %vm466 = vcmask 293888
  %v468 = vsel %vm466, %v169, 0
  %v471 = vsel %vm466, %v173, 0
  %v474 = vsel %vm466, %v177, 0
  %v477 = vsel %vm466, %v181, 0
  %v480 = vsel %vm466, %v185, 0
  %vm482 = vcmask 1041408
  %v484 = vsel %vm482, %v412, 0
  %v487 = vsel %vm482, %v413, 0
  %489 = vmatprep.subr.bf16.mxu0 %v361
  %490 = vmatpush1.bf16.msra.mxu0 %v360
  %491 = vmatprep.subr.bf16.mxu0 %v363
  %492 = vmatpush1.bf16.msra.mxu0 %v362
  %493 = vmatprep.subr.bf16.mxu0 %v365
  %494 = vmatpush1.bf16.msra.mxu0 %v364
  %495 = vmatprep.subr.bf16.mxu0 %v367
  %496 = vmatpush1.bf16.msra.mxu0 %v366
  %497 = vmatprep.subr.bf16.mxu0 %v369
  %498 = vmatpush1.bf16.msra.mxu0 %v368
  %499 = vmatprep.subr.bf16.mxu0 %v371
  %500 = vmatpush1.bf16.msra.mxu0 %v370
  %501 = vmatprep.subr.bf16.mxu0 %v373
  %502 = vmatpush1.bf16.msra.mxu0 %v372
  %503 = vmatprep.subr.bf16.mxu0 %v375
  %504 = vmatpush1.bf16.msra.mxu0 %v374
  %505 = vmatprep.subr.bf16.mxu0 %v377
  %506 = vmatpush1.bf16.msra.mxu0 %v376
  %507 = vmatprep.subr.bf16.mxu0 %v379
  %508 = vmatpush1.bf16.msra.mxu0 %v378
  %509 = vmatprep.subr.bf16.mxu0 %v381
  %510 = vmatpush1.bf16.msra.mxu0 %v380
  %511 = vmatprep.subr.bf16.mxu0 %v383
  %512 = vmatpush1.bf16.msra.mxu0 %v382
  %513 = vmatprep.subr.bf16.mxu0 %v385
  %514 = vmatpush1.bf16.msra.mxu0 %v384
  %515 = vmatprep.subr.bf16.mxu0 %v387
  %516 = vmatpush1.bf16.msra.mxu0 %v386
  %517 = vmatprep.subr.bf16.mxu0 %v389
  %518 = vmatpush1.bf16.msra.mxu0 %v388
  %519 = vmatprep.subr.bf16.mxu0 %v391
  %520 = vmatpush1.bf16.msra.mxu0 %v390
  %521 = vmatprep.mubr.bf16.mxu0 %v167
  %522 = vmatmul.mubr.bf16.gmra.mrb[0].mxu0 %v166
  %v523 = vpop.f32.mrb[0].mxu0
  %v524 = vadd.f32 0.0, %v523
  %v525 = vpop.f32.mrb[0].mxu0
  %v526 = vadd.f32 0.0, %v525
  %v527 = vpop.f32.mrb[0].mxu0
  %v528 = vadd.f32 0.0, %v527
  %v529 = vpop.f32.mrb[0].mxu0
  %v530 = vadd.f32 0.0, %v529
  %531 = vmatprep.mubr.bf16.mxu0 %v171
  %532 = vmatmul.mubr.bf16.gmra.mrb[0].mxu0 %v170
  %v533 = vpop.f32.mrb[0].mxu0
  %v534 = vadd.f32 0.0, %v533
  %v535 = vpop.f32.mrb[0].mxu0
  %v536 = vadd.f32 0.0, %v535
  %v537 = vpop.f32.mrb[0].mxu0
  %v538 = vadd.f32 0.0, %v537
  %v539 = vpop.f32.mrb[0].mxu0
  %v540 = vadd.f32 0.0, %v539
  %541 = vmatprep.mubr.bf16.mxu0 %v175
  %542 = vmatmul.mubr.bf16.gmra.mrb[0].mxu0 %v174
  %v543 = vpop.f32.mrb[0].mxu0
  %v544 = vadd.f32 0.0, %v543
  %v545 = vpop.f32.mrb[0].mxu0
  %v546 = vadd.f32 0.0, %v545
  %v547 = vpop.f32.mrb[0].mxu0
  %v548 = vadd.f32 0.0, %v547
  %v549 = vpop.f32.mrb[0].mxu0
  %v550 = vadd.f32 0.0, %v549
  %551 = vmatprep.mubr.bf16.mxu0 %v179
  %552 = vmatmul.mubr.bf16.gmra.mrb[0].mxu0 %v178
  %v553 = vpop.f32.mrb[0].mxu0
  %v554 = vadd.f32 0.0, %v553
  %v555 = vpop.f32.mrb[0].mxu0
  %v556 = vadd.f32 0.0, %v555
  %v557 = vpop.f32.mrb[0].mxu0
  %v558 = vadd.f32 0.0, %v557
  %v559 = vpop.f32.mrb[0].mxu0
  %v560 = vadd.f32 0.0, %v559
  %561 = vmatprep.mubr.bf16.mxu0 %v183
  %562 = vmatmul.mubr.bf16.gmra.mrb[0].mxu0 %v182
  %v563 = vpop.f32.mrb[0].mxu0
  %v564 = vadd.f32 0.0, %v563
  %v565 = vpop.f32.mrb[0].mxu0
  %v566 = vadd.f32 0.0, %v565
  %v567 = vpop.f32.mrb[0].mxu0
  %v568 = vadd.f32 0.0, %v567
  %v569 = vpop.f32.mrb[0].mxu0
  %v570 = vadd.f32 0.0, %v569
  %571 = vdwg.mxu0
  %572 = vmatprep.subr.bf16.mxu0 %v393
  %573 = vmatpush1.bf16.msra.mxu0 %v392
  %574 = vmatprep.subr.bf16.mxu0 %v395
  %575 = vmatpush1.bf16.msra.mxu0 %v394
  %576 = vmatprep.subr.bf16.mxu0 %v397
  %577 = vmatpush1.bf16.msra.mxu0 %v396
  %578 = vmatprep.subr.bf16.mxu0 %v399
  %579 = vmatpush1.bf16.msra.mxu0 %v398
  %580 = vmatprep.subr.bf16.mxu0 %v401
  %581 = vmatpush1.bf16.msra.mxu0 %v400
  %582 = vmatprep.subr.bf16.mxu0 %v403
  %583 = vmatpush1.bf16.msra.mxu0 %v402
  %584 = vmatprep.subr.bf16.mxu0 %v405
  %585 = vmatpush1.bf16.msra.mxu0 %v404
  %586 = vmatprep.subr.bf16.mxu0 %v407
  %587 = vmatpush1.bf16.msra.mxu0 %v406
  %588 = vmatprep.subr.bf16.mxu0 %v409
  %589 = vmatpush1.bf16.msra.mxu0 %v408
  %590 = vmatprep.subr.bf16.mxu0 %v411
  %591 = vmatpush1.bf16.msra.mxu0 %v410
  %592 = vmatprep.subr.bf16.mxu0 %v487
  %593 = vmatpush1.bf16.msra.mxu0 %v484
  %594 = vmatprep.subr.bf16.mxu0 0
  %595 = vmatpush1.bf16.msra.mxu0 0
  %596 = vmatprep.subr.bf16.mxu0 0
  %597 = vmatpush1.bf16.msra.mxu0 0
  %598 = vmatprep.subr.bf16.mxu0 0
  %599 = vmatpush1.bf16.msra.mxu0 0
  %600 = vmatprep.subr.bf16.mxu0 0
  %601 = vmatpush1.bf16.msra.mxu0 0
  %602 = vmatprep.subr.bf16.mxu0 0
  %603 = vmatpush1.bf16.msra.mxu0 0
  %604 = vmatprep.mubr.bf16.mxu0 %v468
  %605 = vmatmul.mubr.bf16.gmra.mrb[0].mxu0 %v168
  %v606 = vpop.f32.mrb[0].mxu0
  %v607 = vadd.f32 %v524, %v606
  %v608 = vpop.f32.mrb[0].mxu0
  %v609 = vadd.f32 %v526, %v608
  %v610 = vpop.f32.mrb[0].mxu0
  %v611 = vadd.f32 %v528, %v610
  %v612 = vpop.f32.mrb[0].mxu0
  %v613 = vadd.f32 %v530, %v612
  %614 = vmatprep.mubr.bf16.mxu0 %v471
  %615 = vmatmul.mubr.bf16.gmra.mrb[0].mxu0 %v172
  %v616 = vpop.f32.mrb[0].mxu0
  %v617 = vadd.f32 %v534, %v616
  %v618 = vpop.f32.mrb[0].mxu0
  %v619 = vadd.f32 %v536, %v618
  %v620 = vpop.f32.mrb[0].mxu0
  %v621 = vadd.f32 %v538, %v620
  %v622 = vpop.f32.mrb[0].mxu0
  %v623 = vadd.f32 %v540, %v622
  %624 = vmatprep.mubr.bf16.mxu0 %v474
  %625 = vmatmul.mubr.bf16.gmra.mrb[0].mxu0 %v176
  %v626 = vpop.f32.mrb[0].mxu0
  %v627 = vadd.f32 %v544, %v626
  %v628 = vpop.f32.mrb[0].mxu0
  %v629 = vadd.f32 %v546, %v628
  %v630 = vpop.f32.mrb[0].mxu0
  %v631 = vadd.f32 %v548, %v630
  %v632 = vpop.f32.mrb[0].mxu0
  %v633 = vadd.f32 %v550, %v632
  %634 = vmatprep.mubr.bf16.mxu0 %v477
  %635 = vmatmul.mubr.bf16.gmra.mrb[0].mxu0 %v180
  %v636 = vpop.f32.mrb[0].mxu0
  %v637 = vadd.f32 %v554, %v636
  %v638 = vpop.f32.mrb[0].mxu0
  %v639 = vadd.f32 %v556, %v638
  %v640 = vpop.f32.mrb[0].mxu0
  %v641 = vadd.f32 %v558, %v640
  %v642 = vpop.f32.mrb[0].mxu0
  %v643 = vadd.f32 %v560, %v642
  %644 = vmatprep.mubr.bf16.mxu0 %v480
  %645 = vmatmul.mubr.bf16.gmra.mrb[0].mxu0 %v184
  %v646 = vpop.f32.mrb[0].mxu0
  %v647 = vadd.f32 %v564, %v646
  %v648 = vpop.f32.mrb[0].mxu0
  %v649 = vadd.f32 %v566, %v648
  %v650 = vpop.f32.mrb[0].mxu0
  %v651 = vadd.f32 %v568, %v650
  %v652 = vpop.f32.mrb[0].mxu0
  %v653 = vadd.f32 %v570, %v652
  %654 = vdwg.mxu0
  %v655 = vmax.f32 %v607, %v609
  %v656 = vmax.f32 %v611, %v613
  %v657 = vmax.f32 %v617, %v619
  %v658 = vmax.f32 %v621, %v623
  %v659 = vmax.f32 %v627, %v629
  %v660 = vmax.f32 %v631, %v633
  %v661 = vmax.f32 %v637, %v639
  %v662 = vmax.f32 %v641, %v643
  %v663 = vmax.f32 %v647, %v649
  %v664 = vmax.f32 %v651, %v653
  %v665 = vmax.f32 %v655, %v660
  %v666 = vmax.f32 %v656, %v661
  %v667 = vmax.f32 %v657, %v662
  %v668 = vmax.f32 %v658, %v663
  %v669 = vmax.f32 %v659, %v664
  %v670 = vld [vmem:[%s2] sm:$0x1]
  %v672 = vlaneseq
  %v673 = vshrl.u32 %v672, 7
  %v674 = vsub.s32 0, %v673
  %v675 = vrot.slane %v670, %v674
  %v677 = vadd.f32 %v665, %v675
  %v678 = vadd.f32 %v666, %v675
  %v679 = vadd.f32 %v667, %v675
  %v680 = vadd.f32 %v668, %v675
  %v681 = vadd.f32 %v669, %v675
  %v682 = vmax.f32 %v677, 0.0
  %v683 = vmax.f32 %v678, 0.0
  %v684 = vmax.f32 %v679, 0.0
  %v685 = vmax.f32 %v680, 0.0
  %v686 = vmax.f32 %v681, 0.0
  %v687 = vpack.c.bf16 %v682, %v682
  %v688 = vld [vmem:[%s3] sm:$0xf]
  %v689 = vld [vmem:[%s3 + $0x4] sm:$0xf]
  %v690 = vld [vmem:[%s3 + $0x8] sm:$0xf]
  %v691 = vld [vmem:[%s3 + $0xc] sm:$0xf]
  %v692 = vld [vmem:[%s3 + $0x10] sm:$0xf]
  %v693 = vld [vmem:[%s3 + $0x14] sm:$0xf]
  %v694 = vld [vmem:[%s3 + $0x18] sm:$0xf]
  %v695 = vld [vmem:[%s3 + $0x1c] sm:$0xf]
  %v696 = vld [vmem:[%s3 + $0x20] sm:$0xf]
  %v697 = vld [vmem:[%s3 + $0x24] sm:$0xf]
  %v698 = vld [vmem:[%s3 + $0x28] sm:$0xf]
  %v699 = vld [vmem:[%s3 + $0x2c] sm:$0xf]
  %v700 = vld [vmem:[%s3 + $0x30] sm:$0xf]
  %v701 = vld [vmem:[%s3 + $0x34] sm:$0xf]
  %v702 = vld [vmem:[%s3 + $0x38] sm:$0xf]
  %v703 = vld [vmem:[%s3 + $0x3c] sm:$0xf]
  %v704 = vpack.c.bf16 %v683, %v683
  %s705 = scalar_lea.vmem %s3, 64
  %v706 = vld [vmem:[%s705] sm:$0xf]
  %v707 = vld [vmem:[%s705 + $0x4] sm:$0xf]
  %v708 = vld [vmem:[%s705 + $0x8] sm:$0xf]
  %v709 = vld [vmem:[%s705 + $0xc] sm:$0xf]
  %v710 = vld [vmem:[%s705 + $0x10] sm:$0xf]
  %v711 = vld [vmem:[%s705 + $0x14] sm:$0xf]
  %v712 = vld [vmem:[%s705 + $0x18] sm:$0xf]
  %v713 = vld [vmem:[%s705 + $0x1c] sm:$0xf]
  %v714 = vld [vmem:[%s705 + $0x20] sm:$0xf]
  %v715 = vld [vmem:[%s705 + $0x24] sm:$0xf]
  %v716 = vld [vmem:[%s705 + $0x28] sm:$0xf]
  %v717 = vld [vmem:[%s705 + $0x2c] sm:$0xf]
  %v718 = vld [vmem:[%s705 + $0x30] sm:$0xf]
  %v719 = vld [vmem:[%s705 + $0x34] sm:$0xf]
  %v720 = vld [vmem:[%s705 + $0x38] sm:$0xf]
  %v721 = vld [vmem:[%s705 + $0x3c] sm:$0xf]
  %v738 = vunpack.c.l.b16 %v706
  %v739 = vunpack.c.l.b16 %v707
  %v740 = vunpack.c.l.b16 %v708
  %v741 = vunpack.c.l.b16 %v709
  %v742 = vunpack.c.l.b16 %v710
  %v743 = vunpack.c.l.b16 %v711
  %v744 = vunpack.c.l.b16 %v712
  %v745 = vunpack.c.l.b16 %v713
  %v746 = vunpack.c.l.b16 %v714
  %v747 = vunpack.c.l.b16 %v715
  %v748 = vunpack.c.l.b16 %v716
  %v749 = vunpack.c.l.b16 %v717
  %v750 = vunpack.c.l.b16 %v718
  %v751 = vunpack.c.l.b16 %v719
  %v752 = vunpack.c.l.b16 %v720
  %v753 = vunpack.c.l.b16 %v721
  %v754 = vpack.c.b16 %v739, %v738
  %v755 = vpack.c.b16 %v741, %v740
  %v756 = vpack.c.b16 %v743, %v742
  %v757 = vpack.c.b16 %v745, %v744
  %v758 = vpack.c.b16 %v747, %v746
  %v759 = vpack.c.b16 %v749, %v748
  %v760 = vpack.c.b16 %v751, %v750
  %v761 = vpack.c.b16 %v753, %v752
  %770 = vmatprep.subr.bf16.mxu0 0
  %771 = vmatpush1.bf16.msra.mxu0 %v754
  %772 = vmatprep.subr.bf16.mxu0 0
  %773 = vmatpush1.bf16.msra.mxu0 %v755
  %774 = vmatprep.subr.bf16.mxu0 0
  %775 = vmatpush1.bf16.msra.mxu0 %v756
  %776 = vmatprep.subr.bf16.mxu0 0
  %777 = vmatpush1.bf16.msra.mxu0 %v757
  %778 = vmatprep.subr.bf16.mxu0 0
  %779 = vmatpush1.bf16.msra.mxu0 %v758
  %780 = vmatprep.subr.bf16.mxu0 0
  %781 = vmatpush1.bf16.msra.mxu0 %v759
  %782 = vmatprep.subr.bf16.mxu0 0
  %783 = vmatpush1.bf16.msra.mxu0 %v760
  %784 = vmatprep.subr.bf16.mxu0 0
  %785 = vmatpush1.bf16.msra.mxu0 %v761
  %786 = vmatprep.subr.bf16.mxu0 0
  %787 = vmatpush1.bf16.msra.mxu0 0
  %788 = vmatprep.subr.bf16.mxu0 0
  %789 = vmatpush1.bf16.msra.mxu0 0
  %790 = vmatprep.subr.bf16.mxu0 0
  %791 = vmatpush1.bf16.msra.mxu0 0
  %792 = vmatprep.subr.bf16.mxu0 0
  %793 = vmatpush1.bf16.msra.mxu0 0
  %794 = vmatprep.subr.bf16.mxu0 0
  %795 = vmatpush1.bf16.msra.mxu0 0
  %796 = vmatprep.subr.bf16.mxu0 0
  %797 = vmatpush1.bf16.msra.mxu0 0
  %798 = vmatprep.subr.bf16.mxu0 0
  %799 = vmatpush1.bf16.msra.mxu0 0
  %800 = vmatprep.subr.bf16.mxu0 0
  %801 = vmatpush1.bf16.msra.mxu0 0
  %802 = vmatprep.mubr.bf16.mxu0 0
  %803 = vmatmul.mubr.bf16.gmra.mrb[0].mxu0 %v704
  %v804 = vpop.f32.mrb[0].mxu0
  %v805 = vadd.f32 0.0, %v804
  %v806 = vpop.f32.mrb[0].mxu0
  %v807 = vpop.f32.mrb[0].mxu0
  %v808 = vpop.f32.mrb[0].mxu0
  %809 = vdwg.mxu0
  %v826 = vunpack.c.l.b16 %v688
  %v827 = vunpack.c.l.b16 %v689
  %v828 = vunpack.c.l.b16 %v690
  %v829 = vunpack.c.l.b16 %v691
  %v830 = vunpack.c.l.b16 %v692
  %v831 = vunpack.c.l.b16 %v693
  %v832 = vunpack.c.l.b16 %v694
  %v833 = vunpack.c.l.b16 %v695
  %v834 = vunpack.c.l.b16 %v696
  %v835 = vunpack.c.l.b16 %v697
  %v836 = vunpack.c.l.b16 %v698
  %v837 = vunpack.c.l.b16 %v699
  %v838 = vunpack.c.l.b16 %v700
  %v839 = vunpack.c.l.b16 %v701
  %v840 = vunpack.c.l.b16 %v702
  %v841 = vunpack.c.l.b16 %v703
  %v842 = vpack.c.b16 %v827, %v826
  %v843 = vpack.c.b16 %v829, %v828
  %v844 = vpack.c.b16 %v831, %v830
  %v845 = vpack.c.b16 %v833, %v832
  %v846 = vpack.c.b16 %v835, %v834
  %v847 = vpack.c.b16 %v837, %v836
  %v848 = vpack.c.b16 %v839, %v838
  %v849 = vpack.c.b16 %v841, %v840
  %858 = vmatprep.subr.bf16.mxu0 0
  %859 = vmatpush1.bf16.msra.mxu0 %v842
  %860 = vmatprep.subr.bf16.mxu0 0
  %861 = vmatpush1.bf16.msra.mxu0 %v843
  %862 = vmatprep.subr.bf16.mxu0 0
  %863 = vmatpush1.bf16.msra.mxu0 %v844
  %864 = vmatprep.subr.bf16.mxu0 0
  %865 = vmatpush1.bf16.msra.mxu0 %v845
  %866 = vmatprep.subr.bf16.mxu0 0
  %867 = vmatpush1.bf16.msra.mxu0 %v846
  %868 = vmatprep.subr.bf16.mxu0 0
  %869 = vmatpush1.bf16.msra.mxu0 %v847
  %870 = vmatprep.subr.bf16.mxu0 0
  %871 = vmatpush1.bf16.msra.mxu0 %v848
  %872 = vmatprep.subr.bf16.mxu0 0
  %873 = vmatpush1.bf16.msra.mxu0 %v849
  %874 = vmatprep.subr.bf16.mxu0 0
  %875 = vmatpush1.bf16.msra.mxu0 0
  %876 = vmatprep.subr.bf16.mxu0 0
  %877 = vmatpush1.bf16.msra.mxu0 0
  %878 = vmatprep.subr.bf16.mxu0 0
  %879 = vmatpush1.bf16.msra.mxu0 0
  %880 = vmatprep.subr.bf16.mxu0 0
  %881 = vmatpush1.bf16.msra.mxu0 0
  %882 = vmatprep.subr.bf16.mxu0 0
  %883 = vmatpush1.bf16.msra.mxu0 0
  %884 = vmatprep.subr.bf16.mxu0 0
  %885 = vmatpush1.bf16.msra.mxu0 0
  %886 = vmatprep.subr.bf16.mxu0 0
  %887 = vmatpush1.bf16.msra.mxu0 0
  %888 = vmatprep.subr.bf16.mxu0 0
  %889 = vmatpush1.bf16.msra.mxu0 0
  %890 = vmatprep.mubr.bf16.mxu0 0
  %891 = vmatmul.mubr.bf16.gmra.mrb[0].mxu0 %v687
  %v892 = vpop.f32.mrb[0].mxu0
  %v893 = vadd.f32 %v805, %v892
  %v894 = vpop.f32.mrb[0].mxu0
  %v895 = vpop.f32.mrb[0].mxu0
  %v896 = vpop.f32.mrb[0].mxu0
  %897 = vdwg.mxu0
  %v898 = vpack.c.bf16 %v684, %v684
  %s899 = scalar_lea.vmem %s3, 128
  %v900 = vld [vmem:[%s899] sm:$0xf]
  %v901 = vld [vmem:[%s899 + $0x4] sm:$0xf]
  %v902 = vld [vmem:[%s899 + $0x8] sm:$0xf]
  %v903 = vld [vmem:[%s899 + $0xc] sm:$0xf]
  %v904 = vld [vmem:[%s899 + $0x10] sm:$0xf]
  %v905 = vld [vmem:[%s899 + $0x14] sm:$0xf]
  %v906 = vld [vmem:[%s899 + $0x18] sm:$0xf]
  %v907 = vld [vmem:[%s899 + $0x1c] sm:$0xf]
  %v908 = vld [vmem:[%s899 + $0x20] sm:$0xf]
  %v909 = vld [vmem:[%s899 + $0x24] sm:$0xf]
  %v910 = vld [vmem:[%s899 + $0x28] sm:$0xf]
  %v911 = vld [vmem:[%s899 + $0x2c] sm:$0xf]
  %v912 = vld [vmem:[%s899 + $0x30] sm:$0xf]
  %v913 = vld [vmem:[%s899 + $0x34] sm:$0xf]
  %v914 = vld [vmem:[%s899 + $0x38] sm:$0xf]
  %v915 = vld [vmem:[%s899 + $0x3c] sm:$0xf]
  %v932 = vunpack.c.l.b16 %v900
  %v933 = vunpack.c.l.b16 %v901
  %v934 = vunpack.c.l.b16 %v902
  %v935 = vunpack.c.l.b16 %v903
  %v936 = vunpack.c.l.b16 %v904
  %v937 = vunpack.c.l.b16 %v905
  %v938 = vunpack.c.l.b16 %v906
  %v939 = vunpack.c.l.b16 %v907
  %v940 = vunpack.c.l.b16 %v908
  %v941 = vunpack.c.l.b16 %v909
  %v942 = vunpack.c.l.b16 %v910
  %v943 = vunpack.c.l.b16 %v911
  %v944 = vunpack.c.l.b16 %v912
  %v945 = vunpack.c.l.b16 %v913
  %v946 = vunpack.c.l.b16 %v914
  %v947 = vunpack.c.l.b16 %v915
  %v948 = vpack.c.b16 %v933, %v932
  %v949 = vpack.c.b16 %v935, %v934
  %v950 = vpack.c.b16 %v937, %v936
  %v951 = vpack.c.b16 %v939, %v938
  %v952 = vpack.c.b16 %v941, %v940
  %v953 = vpack.c.b16 %v943, %v942
  %v954 = vpack.c.b16 %v945, %v944
  %v955 = vpack.c.b16 %v947, %v946
  %964 = vmatprep.subr.bf16.mxu0 0
  %965 = vmatpush1.bf16.msra.mxu0 %v948
  %966 = vmatprep.subr.bf16.mxu0 0
  %967 = vmatpush1.bf16.msra.mxu0 %v949
  %968 = vmatprep.subr.bf16.mxu0 0
  %969 = vmatpush1.bf16.msra.mxu0 %v950
  %970 = vmatprep.subr.bf16.mxu0 0
  %971 = vmatpush1.bf16.msra.mxu0 %v951
  %972 = vmatprep.subr.bf16.mxu0 0
  %973 = vmatpush1.bf16.msra.mxu0 %v952
  %974 = vmatprep.subr.bf16.mxu0 0
  %975 = vmatpush1.bf16.msra.mxu0 %v953
  %976 = vmatprep.subr.bf16.mxu0 0
  %977 = vmatpush1.bf16.msra.mxu0 %v954
  %978 = vmatprep.subr.bf16.mxu0 0
  %979 = vmatpush1.bf16.msra.mxu0 %v955
  %980 = vmatprep.subr.bf16.mxu0 0
  %981 = vmatpush1.bf16.msra.mxu0 0
  %982 = vmatprep.subr.bf16.mxu0 0
  %983 = vmatpush1.bf16.msra.mxu0 0
  %984 = vmatprep.subr.bf16.mxu0 0
  %985 = vmatpush1.bf16.msra.mxu0 0
  %986 = vmatprep.subr.bf16.mxu0 0
  %987 = vmatpush1.bf16.msra.mxu0 0
  %988 = vmatprep.subr.bf16.mxu0 0
  %989 = vmatpush1.bf16.msra.mxu0 0
  %990 = vmatprep.subr.bf16.mxu0 0
  %991 = vmatpush1.bf16.msra.mxu0 0
  %992 = vmatprep.subr.bf16.mxu0 0
  %993 = vmatpush1.bf16.msra.mxu0 0
  %994 = vmatprep.subr.bf16.mxu0 0
  %995 = vmatpush1.bf16.msra.mxu0 0
  %996 = vmatprep.mubr.bf16.mxu0 0
  %997 = vmatmul.mubr.bf16.gmra.mrb[0].mxu0 %v898
  %v998 = vpop.f32.mrb[0].mxu0
  %v999 = vadd.f32 0.0, %v998
  %v1000 = vpop.f32.mrb[0].mxu0
  %v1001 = vpop.f32.mrb[0].mxu0
  %v1002 = vpop.f32.mrb[0].mxu0
  %1003 = vdwg.mxu0
  %v1004 = vadd.f32 %v893, %v999
  %v1005 = vpack.c.bf16 %v685, %v685
  %s1006 = scalar_lea.vmem %s3, 192
  %v1007 = vld [vmem:[%s1006] sm:$0xf]
  %v1008 = vld [vmem:[%s1006 + $0x4] sm:$0xf]
  %v1009 = vld [vmem:[%s1006 + $0x8] sm:$0xf]
  %v1010 = vld [vmem:[%s1006 + $0xc] sm:$0xf]
  %v1011 = vld [vmem:[%s1006 + $0x10] sm:$0xf]
  %v1012 = vld [vmem:[%s1006 + $0x14] sm:$0xf]
  %v1013 = vld [vmem:[%s1006 + $0x18] sm:$0xf]
  %v1014 = vld [vmem:[%s1006 + $0x1c] sm:$0xf]
  %v1015 = vld [vmem:[%s1006 + $0x20] sm:$0xf]
  %v1016 = vld [vmem:[%s1006 + $0x24] sm:$0xf]
  %v1017 = vld [vmem:[%s1006 + $0x28] sm:$0xf]
  %v1018 = vld [vmem:[%s1006 + $0x2c] sm:$0xf]
  %v1019 = vld [vmem:[%s1006 + $0x30] sm:$0xf]
  %v1020 = vld [vmem:[%s1006 + $0x34] sm:$0xf]
  %v1021 = vld [vmem:[%s1006 + $0x38] sm:$0xf]
  %v1022 = vld [vmem:[%s1006 + $0x3c] sm:$0xf]
  %v1039 = vunpack.c.l.b16 %v1007
  %v1040 = vunpack.c.l.b16 %v1008
  %v1041 = vunpack.c.l.b16 %v1009
  %v1042 = vunpack.c.l.b16 %v1010
  %v1043 = vunpack.c.l.b16 %v1011
  %v1044 = vunpack.c.l.b16 %v1012
  %v1045 = vunpack.c.l.b16 %v1013
  %v1046 = vunpack.c.l.b16 %v1014
  %v1047 = vunpack.c.l.b16 %v1015
  %v1048 = vunpack.c.l.b16 %v1016
  %v1049 = vunpack.c.l.b16 %v1017
  %v1050 = vunpack.c.l.b16 %v1018
  %v1051 = vunpack.c.l.b16 %v1019
  %v1052 = vunpack.c.l.b16 %v1020
  %v1053 = vunpack.c.l.b16 %v1021
  %v1054 = vunpack.c.l.b16 %v1022
  %v1055 = vpack.c.b16 %v1040, %v1039
  %v1056 = vpack.c.b16 %v1042, %v1041
  %v1057 = vpack.c.b16 %v1044, %v1043
  %v1058 = vpack.c.b16 %v1046, %v1045
  %v1059 = vpack.c.b16 %v1048, %v1047
  %v1060 = vpack.c.b16 %v1050, %v1049
  %v1061 = vpack.c.b16 %v1052, %v1051
  %v1062 = vpack.c.b16 %v1054, %v1053
  %1071 = vmatprep.subr.bf16.mxu0 0
  %1072 = vmatpush1.bf16.msra.mxu0 %v1055
  %1073 = vmatprep.subr.bf16.mxu0 0
  %1074 = vmatpush1.bf16.msra.mxu0 %v1056
  %1075 = vmatprep.subr.bf16.mxu0 0
  %1076 = vmatpush1.bf16.msra.mxu0 %v1057
  %1077 = vmatprep.subr.bf16.mxu0 0
  %1078 = vmatpush1.bf16.msra.mxu0 %v1058
  %1079 = vmatprep.subr.bf16.mxu0 0
  %1080 = vmatpush1.bf16.msra.mxu0 %v1059
  %1081 = vmatprep.subr.bf16.mxu0 0
  %1082 = vmatpush1.bf16.msra.mxu0 %v1060
  %1083 = vmatprep.subr.bf16.mxu0 0
  %1084 = vmatpush1.bf16.msra.mxu0 %v1061
  %1085 = vmatprep.subr.bf16.mxu0 0
  %1086 = vmatpush1.bf16.msra.mxu0 %v1062
  %1087 = vmatprep.subr.bf16.mxu0 0
  %1088 = vmatpush1.bf16.msra.mxu0 0
  %1089 = vmatprep.subr.bf16.mxu0 0
  %1090 = vmatpush1.bf16.msra.mxu0 0
  %1091 = vmatprep.subr.bf16.mxu0 0
  %1092 = vmatpush1.bf16.msra.mxu0 0
  %1093 = vmatprep.subr.bf16.mxu0 0
  %1094 = vmatpush1.bf16.msra.mxu0 0
  %1095 = vmatprep.subr.bf16.mxu0 0
  %1096 = vmatpush1.bf16.msra.mxu0 0
  %1097 = vmatprep.subr.bf16.mxu0 0
  %1098 = vmatpush1.bf16.msra.mxu0 0
  %1099 = vmatprep.subr.bf16.mxu0 0
  %1100 = vmatpush1.bf16.msra.mxu0 0
  %1101 = vmatprep.subr.bf16.mxu0 0
  %1102 = vmatpush1.bf16.msra.mxu0 0
  %1103 = vmatprep.mubr.bf16.mxu0 0
  %1104 = vmatmul.mubr.bf16.gmra.mrb[0].mxu0 %v1005
  %v1105 = vpop.f32.mrb[0].mxu0
  %v1106 = vadd.f32 0.0, %v1105
  %v1107 = vpop.f32.mrb[0].mxu0
  %v1108 = vpop.f32.mrb[0].mxu0
  %v1109 = vpop.f32.mrb[0].mxu0
  %1110 = vdwg.mxu0
  %v1111 = vadd.f32 %v1004, %v1106
  %v1112 = vpack.c.bf16 %v686, %v686
  %s1113 = scalar_lea.vmem %s3, 256
  %v1114 = vld [vmem:[%s1113] sm:$0xf]
  %v1115 = vld [vmem:[%s1113 + $0x4] sm:$0xf]
  %v1116 = vld [vmem:[%s1113 + $0x8] sm:$0xf]
  %v1117 = vld [vmem:[%s1113 + $0xc] sm:$0xf]
  %v1118 = vld [vmem:[%s1113 + $0x10] sm:$0xf]
  %v1119 = vld [vmem:[%s1113 + $0x14] sm:$0xf]
  %v1120 = vld [vmem:[%s1113 + $0x18] sm:$0xf]
  %v1121 = vld [vmem:[%s1113 + $0x1c] sm:$0xf]
  %v1122 = vld [vmem:[%s1113 + $0x20] sm:$0xf]
  %v1123 = vld [vmem:[%s1113 + $0x24] sm:$0xf]
  %v1124 = vld [vmem:[%s1113 + $0x28] sm:$0xf]
  %v1125 = vld [vmem:[%s1113 + $0x2c] sm:$0xf]
  %v1126 = vld [vmem:[%s1113 + $0x30] sm:$0xf]
  %v1127 = vld [vmem:[%s1113 + $0x34] sm:$0xf]
  %v1128 = vld [vmem:[%s1113 + $0x38] sm:$0xf]
  %v1129 = vld [vmem:[%s1113 + $0x3c] sm:$0xf]
  %v1146 = vunpack.c.l.b16 %v1114
  %v1147 = vunpack.c.l.b16 %v1115
  %v1148 = vunpack.c.l.b16 %v1116
  %v1149 = vunpack.c.l.b16 %v1117
  %v1150 = vunpack.c.l.b16 %v1118
  %v1151 = vunpack.c.l.b16 %v1119
  %v1152 = vunpack.c.l.b16 %v1120
  %v1153 = vunpack.c.l.b16 %v1121
  %v1154 = vunpack.c.l.b16 %v1122
  %v1155 = vunpack.c.l.b16 %v1123
  %v1156 = vunpack.c.l.b16 %v1124
  %v1157 = vunpack.c.l.b16 %v1125
  %v1158 = vunpack.c.l.b16 %v1126
  %v1159 = vunpack.c.l.b16 %v1127
  %v1160 = vunpack.c.l.b16 %v1128
  %v1161 = vunpack.c.l.b16 %v1129
  %v1162 = vpack.c.b16 %v1147, %v1146
  %v1163 = vpack.c.b16 %v1149, %v1148
  %v1164 = vpack.c.b16 %v1151, %v1150
  %v1165 = vpack.c.b16 %v1153, %v1152
  %v1166 = vpack.c.b16 %v1155, %v1154
  %v1167 = vpack.c.b16 %v1157, %v1156
  %v1168 = vpack.c.b16 %v1159, %v1158
  %v1169 = vpack.c.b16 %v1161, %v1160
  %1178 = vmatprep.subr.bf16.mxu0 0
  %1179 = vmatpush1.bf16.msra.mxu0 %v1162
  %1180 = vmatprep.subr.bf16.mxu0 0
  %1181 = vmatpush1.bf16.msra.mxu0 %v1163
  %1182 = vmatprep.subr.bf16.mxu0 0
  %1183 = vmatpush1.bf16.msra.mxu0 %v1164
  %1184 = vmatprep.subr.bf16.mxu0 0
  %1185 = vmatpush1.bf16.msra.mxu0 %v1165
  %1186 = vmatprep.subr.bf16.mxu0 0
  %1187 = vmatpush1.bf16.msra.mxu0 %v1166
  %1188 = vmatprep.subr.bf16.mxu0 0
  %1189 = vmatpush1.bf16.msra.mxu0 %v1167
  %1190 = vmatprep.subr.bf16.mxu0 0
  %1191 = vmatpush1.bf16.msra.mxu0 %v1168
  %1192 = vmatprep.subr.bf16.mxu0 0
  %1193 = vmatpush1.bf16.msra.mxu0 %v1169
  %1194 = vmatprep.subr.bf16.mxu0 0
  %1195 = vmatpush1.bf16.msra.mxu0 0
  %1196 = vmatprep.subr.bf16.mxu0 0
  %1197 = vmatpush1.bf16.msra.mxu0 0
  %1198 = vmatprep.subr.bf16.mxu0 0
  %1199 = vmatpush1.bf16.msra.mxu0 0
  %1200 = vmatprep.subr.bf16.mxu0 0
  %1201 = vmatpush1.bf16.msra.mxu0 0
  %1202 = vmatprep.subr.bf16.mxu0 0
  %1203 = vmatpush1.bf16.msra.mxu0 0
  %1204 = vmatprep.subr.bf16.mxu0 0
  %1205 = vmatpush1.bf16.msra.mxu0 0
  %1206 = vmatprep.subr.bf16.mxu0 0
  %1207 = vmatpush1.bf16.msra.mxu0 0
  %1208 = vmatprep.subr.bf16.mxu0 0
  %1209 = vmatpush1.bf16.msra.mxu0 0
  %1210 = vmatprep.mubr.bf16.mxu0 0
  %1211 = vmatmul.mubr.bf16.gmra.mrb[0].mxu0 %v1112
  %v1212 = vpop.f32.mrb[0].mxu0
  %v1213 = vadd.f32 0.0, %v1212
  %v1214 = vpop.f32.mrb[0].mxu0
  %v1215 = vpop.f32.mrb[0].mxu0
  %v1216 = vpop.f32.mrb[0].mxu0
  %1217 = vdwg.mxu0
  %v1218 = vadd.f32 %v1111, %v1213
  %v1219 = vld [vmem:[%s4] sm:$0x1]
  %v1221 = vlaneseq
  %v1222 = vshrl.u32 %v1221, 7
  %v1223 = vsub.s32 0, %v1222
  %v1224 = vrot.slane %v1219, %v1223
  %v1226 = vadd.f32 %v1218, %v1224
  %v1227 = vmax.f32 %v1226, 0.0
  %v1228 = vpack.c.bf16 %v1227, %v1227
  %v1229 = vld [vmem:[%s5] sm:$0xf]
  %v1230 = vld [vmem:[%s5 + $0x4] sm:$0xf]
  %v1231 = vld [vmem:[%s5 + $0x8] sm:$0xf]
  %v1232 = vld [vmem:[%s5 + $0xc] sm:$0xf]
  %v1233 = vld [vmem:[%s5 + $0x10] sm:$0xf]
  %v1234 = vld [vmem:[%s5 + $0x14] sm:$0xf]
  %v1235 = vld [vmem:[%s5 + $0x18] sm:$0xf]
  %v1236 = vld [vmem:[%s5 + $0x1c] sm:$0xf]
  %v1237 = vld [vmem:[%s5 + $0x20] sm:$0xf]
  %v1238 = vld [vmem:[%s5 + $0x24] sm:$0xf]
  %v1239 = vld [vmem:[%s5 + $0x28] sm:$0xf]
  %v1240 = vld [vmem:[%s5 + $0x2c] sm:$0xf]
  %v1241 = vld [vmem:[%s5 + $0x30] sm:$0xf]
  %v1242 = vld [vmem:[%s5 + $0x34] sm:$0xf]
  %v1243 = vld [vmem:[%s5 + $0x38] sm:$0xf]
  %v1244 = vld [vmem:[%s5 + $0x3c] sm:$0xf]
  %v1245 = vld [vmem:[%s6] sm:$0x1]
  %v1247 = vlaneseq
  %v1248 = vshrl.u32 %v1247, 7
  %v1249 = vsub.s32 0, %v1248
  %v1250 = vrot.slane %v1245, %v1249
  %v1268 = vunpack.c.l.b16 %v1229
  %v1269 = vunpack.c.l.b16 %v1230
  %v1270 = vunpack.c.l.b16 %v1231
  %v1271 = vunpack.c.l.b16 %v1232
  %v1272 = vunpack.c.l.b16 %v1233
  %v1273 = vunpack.c.l.b16 %v1234
  %v1274 = vunpack.c.l.b16 %v1235
  %v1275 = vunpack.c.l.b16 %v1236
  %v1276 = vunpack.c.l.b16 %v1237
  %v1277 = vunpack.c.l.b16 %v1238
  %v1278 = vunpack.c.l.b16 %v1239
  %v1279 = vunpack.c.l.b16 %v1240
  %v1280 = vunpack.c.l.b16 %v1241
  %v1281 = vunpack.c.l.b16 %v1242
  %v1282 = vunpack.c.l.b16 %v1243
  %v1283 = vunpack.c.l.b16 %v1244
  %v1284 = vpack.c.b16 %v1269, %v1268
  %v1285 = vpack.c.b16 %v1271, %v1270
  %v1286 = vpack.c.b16 %v1273, %v1272
  %v1287 = vpack.c.b16 %v1275, %v1274
  %v1288 = vpack.c.b16 %v1277, %v1276
  %v1289 = vpack.c.b16 %v1279, %v1278
  %v1290 = vpack.c.b16 %v1281, %v1280
  %v1291 = vpack.c.b16 %v1283, %v1282
  %1300 = vmatprep.subr.bf16.mxu0 0
  %1301 = vmatpush1.bf16.msra.mxu0 %v1284
  %1302 = vmatprep.subr.bf16.mxu0 0
  %1303 = vmatpush1.bf16.msra.mxu0 %v1285
  %1304 = vmatprep.subr.bf16.mxu0 0
  %1305 = vmatpush1.bf16.msra.mxu0 %v1286
  %1306 = vmatprep.subr.bf16.mxu0 0
  %1307 = vmatpush1.bf16.msra.mxu0 %v1287
  %1308 = vmatprep.subr.bf16.mxu0 0
  %1309 = vmatpush1.bf16.msra.mxu0 %v1288
  %1310 = vmatprep.subr.bf16.mxu0 0
  %1311 = vmatpush1.bf16.msra.mxu0 %v1289
  %1312 = vmatprep.subr.bf16.mxu0 0
  %1313 = vmatpush1.bf16.msra.mxu0 %v1290
  %1314 = vmatprep.subr.bf16.mxu0 0
  %1315 = vmatpush1.bf16.msra.mxu0 %v1291
  %1316 = vmatprep.subr.bf16.mxu0 0
  %1317 = vmatpush1.bf16.msra.mxu0 0
  %1318 = vmatprep.subr.bf16.mxu0 0
  %1319 = vmatpush1.bf16.msra.mxu0 0
  %1320 = vmatprep.subr.bf16.mxu0 0
  %1321 = vmatpush1.bf16.msra.mxu0 0
  %1322 = vmatprep.subr.bf16.mxu0 0
  %1323 = vmatpush1.bf16.msra.mxu0 0
  %1324 = vmatprep.subr.bf16.mxu0 0
  %1325 = vmatpush1.bf16.msra.mxu0 0
  %1326 = vmatprep.subr.bf16.mxu0 0
  %1327 = vmatpush1.bf16.msra.mxu0 0
  %1328 = vmatprep.subr.bf16.mxu0 0
  %1329 = vmatpush1.bf16.msra.mxu0 0
  %1330 = vmatprep.subr.bf16.mxu0 0
  %1331 = vmatpush1.bf16.msra.mxu0 0
  %1332 = vmatprep.mubr.bf16.mxu0 0
  %1333 = vmatmul.mubr.bf16.gmra.mrb[0].mxu0 %v1228
  %v1334 = vpop.f32.mrb[0].mxu0
  %v1335 = vadd.f32 %v1250, %v1334
  %v1336 = vpop.f32.mrb[0].mxu0
  %v1337 = vpop.f32.mrb[0].mxu0
  %v1338 = vpop.f32.mrb[0].mxu0
  %1339 = vdwg.mxu0
  %v1340 = vmax.f32 %v1335, 0.0
  %v1341 = vpack.c.bf16 %v1340, %v1340
  %v1342 = vld [vmem:[%s7] sm:$0xf]
  %v1343 = vld [vmem:[%s7 + $0x4] sm:$0xf]
  %v1344 = vld [vmem:[%s7 + $0x8] sm:$0xf]
  %v1345 = vld [vmem:[%s7 + $0xc] sm:$0xf]
  %v1346 = vld [vmem:[%s7 + $0x10] sm:$0xf]
  %v1347 = vld [vmem:[%s7 + $0x14] sm:$0xf]
  %v1348 = vld [vmem:[%s7 + $0x18] sm:$0xf]
  %v1349 = vld [vmem:[%s7 + $0x1c] sm:$0xf]
  %v1350 = vld [vmem:[%s7 + $0x20] sm:$0xf]
  %v1351 = vld [vmem:[%s7 + $0x24] sm:$0xf]
  %v1352 = vld [vmem:[%s7 + $0x28] sm:$0xf]
  %v1353 = vld [vmem:[%s7 + $0x2c] sm:$0xf]
  %v1354 = vld [vmem:[%s7 + $0x30] sm:$0xf]
  %v1355 = vld [vmem:[%s7 + $0x34] sm:$0xf]
  %v1356 = vld [vmem:[%s7 + $0x38] sm:$0xf]
  %v1357 = vld [vmem:[%s7 + $0x3c] sm:$0xf]
  %v1358 = vld [vmem:[%s8] sm:$0x1]
  %v1360 = vlaneseq
  %v1361 = vshrl.u32 %v1360, 7
  %v1362 = vsub.s32 0, %v1361
  %v1363 = vrot.slane %v1358, %v1362
  %v1381 = vunpack.c.l.b16 %v1342
  %v1382 = vunpack.c.l.b16 %v1343
  %v1383 = vunpack.c.l.b16 %v1344
  %v1384 = vunpack.c.l.b16 %v1345
  %v1385 = vunpack.c.l.b16 %v1346
  %v1386 = vunpack.c.l.b16 %v1347
  %v1387 = vunpack.c.l.b16 %v1348
  %v1388 = vunpack.c.l.b16 %v1349
  %v1389 = vunpack.c.l.b16 %v1350
  %v1390 = vunpack.c.l.b16 %v1351
  %v1391 = vunpack.c.l.b16 %v1352
  %v1392 = vunpack.c.l.b16 %v1353
  %v1393 = vunpack.c.l.b16 %v1354
  %v1394 = vunpack.c.l.b16 %v1355
  %v1395 = vunpack.c.l.b16 %v1356
  %v1396 = vunpack.c.l.b16 %v1357
  %v1397 = vpack.c.b16 %v1382, %v1381
  %v1398 = vpack.c.b16 %v1384, %v1383
  %v1399 = vpack.c.b16 %v1386, %v1385
  %v1400 = vpack.c.b16 %v1388, %v1387
  %v1401 = vpack.c.b16 %v1390, %v1389
  %v1402 = vpack.c.b16 %v1392, %v1391
  %v1403 = vpack.c.b16 %v1394, %v1393
  %v1404 = vpack.c.b16 %v1396, %v1395
  %1413 = vmatprep.subr.bf16.mxu0 0
  %1414 = vmatpush1.bf16.msra.mxu0 %v1397
  %1415 = vmatprep.subr.bf16.mxu0 0
  %1416 = vmatpush1.bf16.msra.mxu0 %v1398
  %1417 = vmatprep.subr.bf16.mxu0 0
  %1418 = vmatpush1.bf16.msra.mxu0 %v1399
  %1419 = vmatprep.subr.bf16.mxu0 0
  %1420 = vmatpush1.bf16.msra.mxu0 %v1400
  %1421 = vmatprep.subr.bf16.mxu0 0
  %1422 = vmatpush1.bf16.msra.mxu0 %v1401
  %1423 = vmatprep.subr.bf16.mxu0 0
  %1424 = vmatpush1.bf16.msra.mxu0 %v1402
  %1425 = vmatprep.subr.bf16.mxu0 0
  %1426 = vmatpush1.bf16.msra.mxu0 %v1403
  %1427 = vmatprep.subr.bf16.mxu0 0
  %1428 = vmatpush1.bf16.msra.mxu0 %v1404
  %1429 = vmatprep.subr.bf16.mxu0 0
  %1430 = vmatpush1.bf16.msra.mxu0 0
  %1431 = vmatprep.subr.bf16.mxu0 0
  %1432 = vmatpush1.bf16.msra.mxu0 0
  %1433 = vmatprep.subr.bf16.mxu0 0
  %1434 = vmatpush1.bf16.msra.mxu0 0
  %1435 = vmatprep.subr.bf16.mxu0 0
  %1436 = vmatpush1.bf16.msra.mxu0 0
  %1437 = vmatprep.subr.bf16.mxu0 0
  %1438 = vmatpush1.bf16.msra.mxu0 0
  %1439 = vmatprep.subr.bf16.mxu0 0
  %1440 = vmatpush1.bf16.msra.mxu0 0
  %1441 = vmatprep.subr.bf16.mxu0 0
  %1442 = vmatpush1.bf16.msra.mxu0 0
  %1443 = vmatprep.subr.bf16.mxu0 0
  %1444 = vmatpush1.bf16.msra.mxu0 0
  %1445 = vmatprep.mubr.bf16.mxu0 0
  %1446 = vmatmul.mubr.bf16.gmra.mrb[0].mxu0 %v1341
  %v1447 = vpop.f32.mrb[0].mxu0
  %v1448 = vadd.f32 %v1363, %v1447
  %v1449 = vpop.f32.mrb[0].mxu0
  %v1450 = vpop.f32.mrb[0].mxu0
  %v1451 = vpop.f32.mrb[0].mxu0
  %1452 = vdwg.mxu0
  %1453 = vst [vmem:[%s9] sm:$0xff] %v1448
  // Predicated region
  $region38: #{cnn_forward.1} parent=0 // pred_check
    _
  $region39: #{cnn_forward.1} parent=0 // pred_check_branch
    %1455 = sbr.rel (0) target = $region41
  $region40: #{cnn_forward.1} parent=0 // pred_region
    _
  $region41: #{cnn_forward.1} parent=0 // pred_fallthru
    _
  // Predicated region
  $region42: #{cnn_forward.1} parent=0 // pred_check
    _
  $region43: #{cnn_forward.1} parent=0 // pred_check_branch
    %1457 = sbr.rel (0) target = $region45
  $region44: #{cnn_forward.1} parent=0 // pred_region
    _
  $region45: #{cnn_forward.1} parent=0 // pred_fallthru
    _

</llo_original>
